<compile_context>
chip_gen: v5e
topology: v5e:2x2
jax: 0.10.0
libtpu: 0.0.40
codegen_flags: <defaults>
</compile_context>

<pallas_src>
import functools

import jax
import jax.numpy as jnp
from jax.experimental import pallas as pl
from jax.experimental.pallas import tpu as pltpu

# ----------------------------- configuration --------------------------------
B = 2            # batch size
C_IN = 3         # image channels
IMG = 16         # spatial size (small stand-in for 224)
C_FEAT = 32      # surrogate backbone feature channels (stand-in for 2048)
EMBED = 32       # embed_dim
HIDDEN = 32      # hidden_dim
VOCAB = 64       # vocab_size
MAX_LEN = 8      # captions.shape[1]
VOCAB_PAD = ((VOCAB + 127) // 128) * 128       # pad vocab to full 128-lane width

ROW = 8          # sublane stride per time-step group (one (8,128) tile each)

# ---- encoder-param slab layout (lane width ENC_W, rows sublane-aligned) ----
K_PATCH = 9 * C_IN                              # 27 (im2col contraction)
K_PATCH_PAD = ((K_PATCH + 7) // 8) * 8          # 32 (padded contraction)
WEMB_ROW = K_PATCH_PAD                          # 32
GAMMA_ROW = WEMB_ROW + C_FEAT                   # 64
BETA_ROW = GAMMA_ROW + 1                        # 65
BEMB_ROW = GAMMA_ROW + 2                        # 66
ENC_ROWS = ((BEMB_ROW + 1 + 7) // 8) * 8        # 72
ENC_W = max(C_FEAT, EMBED)                      # 32

# ---- decoder-param slab layout (lane width DEC_W = 128) --------------------
WIH_ROW = 0
WHH_ROW = WIH_ROW + EMBED                       # 32
WPRED_ROW = WHH_ROW + HIDDEN                    # 64
BLSTM_ROW = ((WPRED_ROW + HIDDEN + 7) // 8) * 8  # 96
BPRED_ROW = BLSTM_ROW + 8                       # 104
DEC_ROWS = BPRED_ROW + 8                        # 112
DEC_W = max(4 * HIDDEN, VOCAB_PAD)              # 128


# ----------------------------- parameter init -------------------------------
def weight_norm_effective(v, g):
    """PyTorch weight_norm(Linear) default dim=0: W = g * v / ||v||_row."""
    norm = jnp.sqrt(jnp.sum(v * v, axis=1, keepdims=True))
    return v * (g[:, None] / norm)


def init_params(key):
    ks = jax.random.split(key, 12)
    s = 0.1
    p = {}
    # surrogate encoder backbone: 3x3 conv (no bias) + BN
    p["conv_w"] = jax.random.normal(ks[0], (3, 3, C_IN, C_FEAT), jnp.float32) * s
    p["bn_gamma"] = jnp.ones((C_FEAT,), jnp.float32)
    p["bn_beta"] = jnp.zeros((C_FEAT,), jnp.float32)
    # weight-norm img_embedding: Linear(C_FEAT -> EMBED)
    p["emb_v"] = jax.random.normal(ks[1], (EMBED, C_FEAT), jnp.float32) * s
    p["emb_g"] = 1.0 + 0.05 * jax.random.normal(ks[2], (EMBED,), jnp.float32)
    p["emb_b"] = jax.random.normal(ks[3], (EMBED,), jnp.float32) * s
    # decoder: embedding, LSTMCell, weight-norm predict Linear(HIDDEN -> VOCAB)
    p["embed_table"] = jax.random.normal(ks[4], (VOCAB, EMBED), jnp.float32) * s
    p["w_ih"] = jax.random.normal(ks[5], (4 * HIDDEN, EMBED), jnp.float32) * s
    p["w_hh"] = jax.random.normal(ks[6], (4 * HIDDEN, HIDDEN), jnp.float32) * s
    p["b_ih"] = jax.random.normal(ks[7], (4 * HIDDEN,), jnp.float32) * s
    p["b_hh"] = jax.random.normal(ks[8], (4 * HIDDEN,), jnp.float32) * s
    p["pred_v"] = jax.random.normal(ks[9], (VOCAB, HIDDEN), jnp.float32) * s
    p["pred_g"] = 1.0 + 0.05 * jax.random.normal(ks[10], (VOCAB,), jnp.float32)
    p["pred_b"] = jax.random.normal(ks[11], (VOCAB,), jnp.float32) * s
    return p


# ----------------------------- glue: im2col ----------------------------------
def im2col_3x3_same(x_nhwc):
    b, h, w, c = x_nhwc.shape
    xp = jnp.pad(x_nhwc, ((0, 0), (1, 1), (1, 1), (0, 0)))
    cols = []
    for kh in range(3):
        for kw in range(3):
            cols.append(xp[:, kh:kh + h, kw:kw + w, :])
    patches = jnp.concatenate(cols, axis=-1)                  # (B, H, W, 9*C)
    return patches.reshape(b * h * w, 9 * c)


# ----------------------------- fused forward kernel -------------------------
def nic_kernel(patch_ref, enc_ref, emb_ref, dec_ref, out_ref,
               xin_scr, hall_scr, *, bsize, n_steps, hw):
    f32 = jnp.float32
    H = HIDDEN

    # ---- static slab slices (free ref windows, each loaded exactly once) ----
    conv_w = enc_ref[0:K_PATCH_PAD, 0:C_FEAT]                    # (32, C_FEAT)
    w_emb = enc_ref[WEMB_ROW:WEMB_ROW + C_FEAT, 0:EMBED]         # (C_FEAT, E)
    gamma = enc_ref[GAMMA_ROW:GAMMA_ROW + 1, 0:C_FEAT]           # (1, C_FEAT)
    beta = enc_ref[BETA_ROW:BETA_ROW + 1, 0:C_FEAT]              # (1, C_FEAT)
    b_emb = enc_ref[BEMB_ROW:BEMB_ROW + 1, 0:EMBED]              # (1, E)

    w_ih = dec_ref[WIH_ROW:WIH_ROW + EMBED, 0:4 * H]             # (E, 4H)
    w_hh = dec_ref[WHH_ROW:WHH_ROW + H, 0:4 * H]                 # (H, 4H)
    w_pred = dec_ref[WPRED_ROW:WPRED_ROW + H, 0:VOCAB_PAD]       # (H, VPAD)
    b_lstm = dec_ref[BLSTM_ROW:BLSTM_ROW + 1, 0:4 * H]           # (1, 4H)
    b_pred = dec_ref[BPRED_ROW:BPRED_ROW + 1, 0:VOCAB_PAD]       # (1, VPAD)

    # ------------------ surrogate encoder (runs once) -----------------------
    # conv as im2col matmul: (B*HW, Kpad) @ (Kpad, C_feat)
    y = jnp.dot(patch_ref[...], conv_w, preferred_element_type=f32)
    # training-mode batch-norm, two-pass variance (robust to large activations)
    mean = jnp.mean(y, axis=0, keepdims=True)
    yc = y - mean
    var = jnp.mean(yc * yc, axis=0, keepdims=True)
    y = yc * jax.lax.rsqrt(var + 1e-5)
    y = jnp.maximum(y * gamma + beta, 0.0)                       # ReLU
    # global average pool: per-image sublane reduction as a value (no scratch)
    pooled = jnp.mean(y.reshape(bsize, hw, C_FEAT), axis=1)      # (B, C_FEAT)
    # weight-norm img_embedding -> image features (B, EMBED)
    feats = jnp.dot(pooled, w_emb, preferred_element_type=f32) + b_emb

    # --------------------------- decoder -------------------------------------
    # fold init_hidden_state gates into the hoisted input projection:
    #   group 0 rows = image features, group (t+1) rows = step-t embeddings.
    xin_scr[...] = emb_ref[...]
    xin_scr[0:bsize, :] = feats
    xp = (jnp.dot(xin_scr[...], w_ih, preferred_element_type=f32)
          + b_lstm)                                              # ((T+1)*8, 4H)

    # gate lane mask hoisted out of the recurrence (PyTorch gate order i,f,g,o)
    lane = jax.lax.broadcasted_iota(jnp.int32, (bsize, 4 * H), 1)
    is_g = jnp.logical_and(lane >= 2 * H, lane < 3 * H)

    def gate_act(g):
        # one tanh + one sigmoid over the full 128-lane gates vreg
        return jnp.where(is_g, jnp.tanh(g), jax.nn.sigmoid(g))

    def lstm_combine(act, c_prev):
        i = act[:, 0:H]
        f = act[:, H:2 * H]
        g = act[:, 2 * H:3 * H]
        o = act[:, 3 * H:4 * H]
        c_new = f * c_prev + i * g
        return o * jnp.tanh(c_new), c_new

    # init_hidden_state: (h, c) = LSTMCell(features, (0, 0))  -> xp group 0
    h, c = lstm_combine(gate_act(xp[0:bsize, :]),
                        jnp.zeros((bsize, H), f32))

    hall_scr[...] = jnp.zeros_like(hall_scr)
    # recurrence, fully unrolled (n_steps static & tiny): only h @ W_hh remains
    # in the loop; each step's h store gets its own (8,128) tile (row t*8).
    for t in range(n_steps):
        r = (t + 1) * ROW
        gates = xp[r:r + bsize, :] + jnp.dot(h, w_hh,
                                             preferred_element_type=f32)
        h, c = lstm_combine(gate_act(gates), c)
        hall_scr[t * ROW:t * ROW + bsize, :] = h

    # one batched, lane-dense vocab projection + single unmasked output store
    # (dropout is eval-mode identity).
    out_ref[...] = (jnp.dot(hall_scr[...], w_pred, preferred_element_type=f32)
                    + b_pred).astype(out_ref.dtype)


# ----------------------------- NIC_Captioner forward ------------------------
def nic_forward(params, visual_inputs, captions, lengths):
    images = visual_inputs["img_tensors"]
    bsize = images.shape[0]
    ts = captions.shape[1] - 1          # training time steps (== max(lengths))
    hw = IMG * IMG
    m = bsize * hw
    xin_rows = (ts + 1) * ROW
    out_rows = ts * ROW

    # -------- glue: layout prep only (no matmuls, no per-step ops) ----------
    x_nhwc = jnp.transpose(images, (0, 2, 3, 1))                # NCHW -> NHWC
    patches = im2col_3x3_same(x_nhwc)                           # (M, 27)
    patches = jnp.pad(patches, ((0, 0), (0, K_PATCH_PAD - K_PATCH)))  # (M, 32)

    # encoder-param slab (single DMA)
    conv_w = params["conv_w"].reshape(K_PATCH, C_FEAT)
    w_emb = weight_norm_effective(params["emb_v"], params["emb_g"]).T   # (C_FEAT, E)
    enc_slab = jnp.zeros((ENC_ROWS, ENC_W), jnp.float32)
    enc_slab = enc_slab.at[0:K_PATCH, 0:C_FEAT].set(conv_w)
    enc_slab = enc_slab.at[WEMB_ROW:WEMB_ROW + C_FEAT, 0:EMBED].set(w_emb)
    enc_slab = enc_slab.at[GAMMA_ROW, 0:C_FEAT].set(params["bn_gamma"])
    enc_slab = enc_slab.at[BETA_ROW, 0:C_FEAT].set(params["bn_beta"])
    enc_slab = enc_slab.at[BEMB_ROW, 0:EMBED].set(params["emb_b"])

    # decoder-param slab (single DMA, 128 lanes)
    w_ih_t = params["w_ih"].T                                   # (E, 4H)
    w_hh_t = params["w_hh"].T                                   # (H, 4H)
    b_lstm = params["b_ih"] + params["b_hh"]                    # (4H,)
    w_pred = weight_norm_effective(params["pred_v"], params["pred_g"]).T  # (H, V)
    w_pred = jnp.pad(w_pred, ((0, 0), (0, VOCAB_PAD - VOCAB)))
    b_pred = jnp.pad(params["pred_b"], (0, VOCAB_PAD - VOCAB))
    dec_slab = jnp.zeros((DEC_ROWS, DEC_W), jnp.float32)
    dec_slab = dec_slab.at[WIH_ROW:WIH_ROW + EMBED, 0:4 * HIDDEN].set(w_ih_t)
    dec_slab = dec_slab.at[WHH_ROW:WHH_ROW + HIDDEN, 0:4 * HIDDEN].set(w_hh_t)
    dec_slab = dec_slab.at[WPRED_ROW:WPRED_ROW + HIDDEN, 0:VOCAB_PAD].set(w_pred)
    dec_slab = dec_slab.at[BLSTM_ROW, 0:4 * HIDDEN].set(b_lstm)
    dec_slab = dec_slab.at[BPRED_ROW, 0:VOCAB_PAD].set(b_pred)

    # per-step token embeddings, one 8-row group per step; group 0 reserved for
    # the image features (filled inside the kernel).
    emb_bt = params["embed_table"][captions[:, :ts]]            # (B, T, E) gather
    emb_pad = jnp.zeros((ts + 1, ROW, EMBED), jnp.float32)
    emb_pad = emb_pad.at[1:, :bsize, :].set(jnp.transpose(emb_bt, (1, 0, 2)))
    emb_pad = emb_pad.reshape(xin_rows, EMBED)

    kernel = functools.partial(nic_kernel, bsize=bsize, n_steps=ts, hw=hw)
    full = lambda i: (0, 0)   # every operand resident in VMEM, fetched once

    flops = 2 * (m * K_PATCH_PAD * C_FEAT            # conv
                 + bsize * C_FEAT * EMBED            # img embedding
                 + xin_rows * EMBED * 4 * HIDDEN     # hoisted input proj
                 + ts * bsize * HIDDEN * 4 * HIDDEN  # recurrence (h @ W_hh)
                 + out_rows * HIDDEN * VOCAB_PAD)    # vocab projection
    cost = pl.CostEstimate(
        flops=flops,
        transcendentals=(ts + 1) * bsize * 5 * HIDDEN,
        bytes_accessed=4 * (patches.size + enc_slab.size + emb_pad.size
                            + dec_slab.size + out_rows * VOCAB_PAD))

    preds_pad = pl.pallas_call(
        kernel,
        out_shape=jax.ShapeDtypeStruct((out_rows, VOCAB_PAD), jnp.float32),
        grid_spec=pltpu.PrefetchScalarGridSpec(
            num_scalar_prefetch=0,
            grid=(1,),   # whole forward = one grid step (no per-step overhead)
            in_specs=[
                pl.BlockSpec((m, K_PATCH_PAD), full),        # im2col patches
                pl.BlockSpec((ENC_ROWS, ENC_W), full),       # encoder params
                pl.BlockSpec((xin_rows, EMBED), full),       # step embeddings
                pl.BlockSpec((DEC_ROWS, DEC_W), full),       # decoder params
            ],
            out_specs=pl.BlockSpec((out_rows, VOCAB_PAD), full),
            scratch_shapes=[
                pltpu.VMEM((xin_rows, EMBED), jnp.float32),  # feats + embeddings
                pltpu.VMEM((out_rows, HIDDEN), jnp.float32),  # all h_t (row t*8+b)
            ],
        ),
        compiler_params=pltpu.CompilerParams(
            dimension_semantics=("arbitrary",)),
        cost_estimate=cost,
    )(patches, enc_slab, emb_pad, dec_slab)

    # -------- pack_padded_sequence(batch_first=True) as one gather ----------
    lengths_list = [int(l) for l in lengths]
    assert all(lengths_list[i] >= lengths_list[i + 1]
               for i in range(len(lengths_list) - 1)), \
        "pack_padded_sequence requires lengths sorted in descending order"
    max_len = max(lengths_list)
    batch_sizes = [sum(1 for l in lengths_list if l > t) for t in range(max_len)]
    pack_rows = jnp.asarray(
        [t * ROW + b for t, bs in enumerate(batch_sizes) for b in range(bs)],
        jnp.int32)
    packed_data = preds_pad[pack_rows, :VOCAB]   # single gather + lane slice
    return packed_data, jnp.asarray(batch_sizes, jnp.int32)


# ----------------------------------- main ------------------------------------
if __name__ == "__main__":
    key = jax.random.PRNGKey(0)
    pkey, ikey, ckey = jax.random.split(key, 3)
    params = init_params(pkey)

    images = jax.random.normal(ikey, (B, C_IN, IMG, IMG), jnp.float32)
    lengths = [7, 5]                                            # sorted descending
    captions = jax.random.randint(ckey, (B, MAX_LEN), 3, VOCAB, dtype=jnp.int32)
    captions = captions.at[:, 0].set(1)                         # <sta>
    captions = captions.at[0, 7].set(2)                         # <end>
    captions = captions.at[1, 5].set(2)                         # <end>
    captions = captions.at[1, 6:].set(0)                        # pad

    visual_inputs = {"img_tensors": images}
    packed_data, batch_sizes = nic_forward(params, visual_inputs, captions, lengths)
    jax.block_until_ready(packed_data)
    assert packed_data.shape == (sum(lengths), VOCAB)
    print("KERNEL_OK")
</pallas_src>

<mosaic_0001>
module attributes {stable_mosaic.version = 11 : i64} {
  func.func @nic_kernel(%arg0: i32, %arg1: memref<512x32xf32, #tpu.memory_space<vmem>>, %arg2: memref<72x32xf32, #tpu.memory_space<vmem>>, %arg3: memref<64x32xf32, #tpu.memory_space<vmem>>, %arg4: memref<112x128xf32, #tpu.memory_space<vmem>>, %arg5: memref<56x128xf32, #tpu.memory_space<vmem>>, %arg6: memref<64x32xf32, #tpu.memory_space<vmem>>, %arg7: memref<56x32xf32, #tpu.memory_space<vmem>>) attributes {dimension_semantics = [#tpu.dimension_semantics<arbitrary>], iteration_bounds = array<i64: 1>, scalar_prefetch = 0 : i64, scratch_operands = 2 : i64, tpu.core_type = #tpu.core_type<tc>, window_params = [{pipeline_mode = #tpu.pipeline_mode<synchronous>, transform_indices = @transform_0, window_bounds = array<i64: 512, 32>}, {pipeline_mode = #tpu.pipeline_mode<synchronous>, transform_indices = @transform_1, window_bounds = array<i64: 72, 32>}, {pipeline_mode = #tpu.pipeline_mode<synchronous>, transform_indices = @transform_2, window_bounds = array<i64: 64, 32>}, {pipeline_mode = #tpu.pipeline_mode<synchronous>, transform_indices = @transform_3, window_bounds = array<i64: 112, 128>}, {pipeline_mode = #tpu.pipeline_mode<synchronous>, transform_indices = @transform_4, window_bounds = array<i64: 56, 128>}]} {
    %c0 = arith.constant 0 : index
    %c0_0 = arith.constant 0 : index
    %0 = vector.load %arg2[%c0, %c0_0] : memref<72x32xf32, #tpu.memory_space<vmem>>, vector<32x32xf32>
    %c32 = arith.constant 32 : index
    %c0_1 = arith.constant 0 : index
    %1 = vector.load %arg2[%c32, %c0_1] : memref<72x32xf32, #tpu.memory_space<vmem>>, vector<32x32xf32>
    %c64 = arith.constant 64 : index
    %c0_2 = arith.constant 0 : index
    %2 = vector.load %arg2[%c64, %c0_2] : memref<72x32xf32, #tpu.memory_space<vmem>>, vector<1x32xf32>
    %c65 = arith.constant 65 : index
    %c0_3 = arith.constant 0 : index
    %3 = vector.load %arg2[%c65, %c0_3] : memref<72x32xf32, #tpu.memory_space<vmem>>, vector<1x32xf32>
    %c66 = arith.constant 66 : index
    %c0_4 = arith.constant 0 : index
    %4 = vector.load %arg2[%c66, %c0_4] : memref<72x32xf32, #tpu.memory_space<vmem>>, vector<1x32xf32>
    %c0_5 = arith.constant 0 : index
    %c0_6 = arith.constant 0 : index
    %5 = vector.load %arg4[%c0_5, %c0_6] : memref<112x128xf32, #tpu.memory_space<vmem>>, vector<32x128xf32>
    %c32_7 = arith.constant 32 : index
    %c0_8 = arith.constant 0 : index
    %6 = vector.load %arg4[%c32_7, %c0_8] : memref<112x128xf32, #tpu.memory_space<vmem>>, vector<32x128xf32>
    %c64_9 = arith.constant 64 : index
    %c0_10 = arith.constant 0 : index
    %7 = vector.load %arg4[%c64_9, %c0_10] : memref<112x128xf32, #tpu.memory_space<vmem>>, vector<32x128xf32>
    %c96 = arith.constant 96 : index
    %c0_11 = arith.constant 0 : index
    %8 = vector.load %arg4[%c96, %c0_11] : memref<112x128xf32, #tpu.memory_space<vmem>>, vector<1x128xf32>
    %c104 = arith.constant 104 : index
    %c0_12 = arith.constant 0 : index
    %9 = vector.load %arg4[%c104, %c0_12] : memref<112x128xf32, #tpu.memory_space<vmem>>, vector<1x128xf32>
    %c0_13 = arith.constant 0 : index
    %c0_14 = arith.constant 0 : index
    %10 = vector.load %arg1[%c0_13, %c0_14] : memref<512x32xf32, #tpu.memory_space<vmem>>, vector<512x32xf32>
    %cst = arith.constant dense<0.000000e+00> : vector<512x32xf32>
    %11 = tpu.matmul %10, %0, %cst {dimension_numbers = #tpu.dot_dimension_numbers<[1], [0], [0], [1], [0, 0, 1, 1], [], []>} : vector<512x32xf32>, vector<32x32xf32>, vector<512x32xf32> -> vector<512x32xf32>
    %cst_15 = arith.constant dense<0.000000e+00> : vector<32xf32>
    %12 = vector.multi_reduction <add>, %11, %cst_15 [0] : vector<512x32xf32> to vector<32xf32>
    %13 = vector.shape_cast %12 : vector<32xf32> to vector<1x32xf32>
    %cst_16 = arith.constant 5.120000e+02 : f32
    %14 = vector.broadcast %cst_16 : f32 to vector<1x32xf32>
    %15 = arith.divf %13, %14 : vector<1x32xf32>
    %16 = vector.broadcast %15 : vector<1x32xf32> to vector<512x32xf32>
    %17 = arith.subf %11, %16 : vector<512x32xf32>
    %18 = arith.mulf %17, %17 : vector<512x32xf32>
    %cst_17 = arith.constant dense<0.000000e+00> : vector<32xf32>
    %19 = vector.multi_reduction <add>, %18, %cst_17 [0] : vector<512x32xf32> to vector<32xf32>
    %20 = vector.shape_cast %19 : vector<32xf32> to vector<1x32xf32>
    %cst_18 = arith.constant 5.120000e+02 : f32
    %21 = vector.broadcast %cst_18 : f32 to vector<1x32xf32>
    %22 = arith.divf %20, %21 : vector<1x32xf32>
    %cst_19 = arith.constant 9.99999974E-6 : f32
    %23 = vector.broadcast %cst_19 : f32 to vector<1x32xf32>
    %24 = arith.addf %22, %23 : vector<1x32xf32>
    %25 = math.rsqrt %24 : vector<1x32xf32>
    %26 = vector.broadcast %25 : vector<1x32xf32> to vector<512x32xf32>
    %27 = arith.mulf %17, %26 : vector<512x32xf32>
    %28 = vector.broadcast %2 : vector<1x32xf32> to vector<512x32xf32>
    %29 = arith.mulf %27, %28 : vector<512x32xf32>
    %30 = vector.broadcast %3 : vector<1x32xf32> to vector<512x32xf32>
    %31 = arith.addf %29, %30 : vector<512x32xf32>
    %cst_20 = arith.constant 0.000000e+00 : f32
    %32 = vector.broadcast %cst_20 : f32 to vector<512x32xf32>
    %33 = arith.maximumf %31, %32 : vector<512x32xf32>
    %34 = vector.shape_cast %33 : vector<512x32xf32> to vector<2x256x32xf32>
    %cst_21 = arith.constant dense<0.000000e+00> : vector<2x32xf32>
    %35 = vector.multi_reduction <add>, %34, %cst_21 [1] : vector<2x256x32xf32> to vector<2x32xf32>
    %cst_22 = arith.constant 2.560000e+02 : f32
    %36 = vector.broadcast %cst_22 : f32 to vector<2x32xf32>
    %37 = arith.divf %35, %36 : vector<2x32xf32>
    %cst_23 = arith.constant dense<0.000000e+00> : vector<2x32xf32>
    %38 = tpu.matmul %37, %1, %cst_23 {dimension_numbers = #tpu.dot_dimension_numbers<[1], [0], [0], [1], [0, 0, 1, 1], [], []>} : vector<2x32xf32>, vector<32x32xf32>, vector<2x32xf32> -> vector<2x32xf32>
    %39 = vector.broadcast %4 : vector<1x32xf32> to vector<2x32xf32>
    %40 = arith.addf %38, %39 : vector<2x32xf32>
    %c0_24 = arith.constant 0 : index
    %c0_25 = arith.constant 0 : index
    %41 = vector.load %arg3[%c0_24, %c0_25] : memref<64x32xf32, #tpu.memory_space<vmem>>, vector<64x32xf32>
    %c0_26 = arith.constant 0 : index
    %c0_27 = arith.constant 0 : index
    %42 = vector.load %arg6[%c0_26, %c0_27] : memref<64x32xf32, #tpu.memory_space<vmem>>, vector<64x32xf32>
    tpu.vector_store %arg6[%c0_26, %c0_27], %41 {strides = array<i32>} : memref<64x32xf32, #tpu.memory_space<vmem>>, vector<64x32xf32>,
    %c0_28 = arith.constant 0 : index
    %c0_29 = arith.constant 0 : index
    %43 = vector.load %arg6[%c0_28, %c0_29] : memref<64x32xf32, #tpu.memory_space<vmem>>, vector<2x32xf32>
    tpu.vector_store %arg6[%c0_28, %c0_29], %40 {strides = array<i32>} : memref<64x32xf32, #tpu.memory_space<vmem>>, vector<2x32xf32>,
    %c0_30 = arith.constant 0 : index
    %c0_31 = arith.constant 0 : index
    %44 = vector.load %arg6[%c0_30, %c0_31] : memref<64x32xf32, #tpu.memory_space<vmem>>, vector<64x32xf32>
    %cst_32 = arith.constant dense<0.000000e+00> : vector<64x128xf32>
    %45 = tpu.matmul %44, %5, %cst_32 {dimension_numbers = #tpu.dot_dimension_numbers<[1], [0], [0], [1], [0, 0, 1, 1], [], []>} : vector<64x32xf32>, vector<32x128xf32>, vector<64x128xf32> -> vector<64x128xf32>
    %46 = vector.broadcast %8 : vector<1x128xf32> to vector<64x128xf32>
    %47 = arith.addf %45, %46 : vector<64x128xf32>
    %48 = tpu.iota {dimensions = array<i32: 1>} : vector<2x128xi32>
    %c64_i32 = arith.constant 64 : i32
    %49 = vector.broadcast %c64_i32 : i32 to vector<2x128xi32>
    %50 = arith.cmpi sge, %48, %49 : vector<2x128xi32>
    %c96_i32 = arith.constant 96 : i32
    %51 = vector.broadcast %c96_i32 : i32 to vector<2x128xi32>
    %52 = arith.cmpi slt, %48, %51 : vector<2x128xi32>
    %53 = arith.andi %50, %52 : vector<2x128xi1>
    %54 = vector.extract_strided_slice %47 {offsets = [0, 0], sizes = [2, 128], strides = [1, 1]} : vector<64x128xf32> to vector<2x128xf32>
    %55 = math.tanh %54 : vector<2x128xf32>
    %56 = arith.negf %54 : vector<2x128xf32>
    %57 = math.exp %56 : vector<2x128xf32>
    %cst_33 = arith.constant 1.000000e+00 : f32
    %58 = vector.broadcast %cst_33 : f32 to vector<2x128xf32>
    %59 = arith.addf %58, %57 : vector<2x128xf32>
    %60 = arith.divf %58, %59 : vector<2x128xf32>
    %61 = arith.select %53, %55, %60 : vector<2x128xi1>, vector<2x128xf32>
    %cst_34 = arith.constant 0.000000e+00 : f32
    %62 = vector.broadcast %cst_34 : f32 to vector<2x32xf32>
    %63 = vector.extract_strided_slice %61 {offsets = [0, 0], sizes = [2, 32], strides = [1, 1]} : vector<2x128xf32> to vector<2x32xf32>
    %64 = vector.extract_strided_slice %61 {offsets = [0, 32], sizes = [2, 32], strides = [1, 1]} : vector<2x128xf32> to vector<2x32xf32>
    %65 = vector.extract_strided_slice %61 {offsets = [0, 64], sizes = [2, 32], strides = [1, 1]} : vector<2x128xf32> to vector<2x32xf32>
    %66 = vector.extract_strided_slice %61 {offsets = [0, 96], sizes = [2, 32], strides = [1, 1]} : vector<2x128xf32> to vector<2x32xf32>
    %67 = arith.mulf %64, %62 : vector<2x32xf32>
    %68 = arith.mulf %63, %65 : vector<2x32xf32>
    %69 = arith.addf %67, %68 : vector<2x32xf32>
    %70 = math.tanh %69 : vector<2x32xf32>
    %71 = arith.mulf %66, %70 : vector<2x32xf32>
    %cst_35 = arith.constant 0.000000e+00 : f32
    %72 = vector.broadcast %cst_35 : f32 to vector<56x32xf32>
    %c0_36 = arith.constant 0 : index
    %c0_37 = arith.constant 0 : index
    %73 = vector.load %arg7[%c0_36, %c0_37] : memref<56x32xf32, #tpu.memory_space<vmem>>, vector<56x32xf32>
    tpu.vector_store %arg7[%c0_36, %c0_37], %72 {strides = array<i32>} : memref<56x32xf32, #tpu.memory_space<vmem>>, vector<56x32xf32>,
    %74 = vector.extract_strided_slice %47 {offsets = [8, 0], sizes = [2, 128], strides = [1, 1]} : vector<64x128xf32> to vector<2x128xf32>
    %cst_38 = arith.constant dense<0.000000e+00> : vector<2x128xf32>
    %75 = tpu.matmul %71, %6, %cst_38 {dimension_numbers = #tpu.dot_dimension_numbers<[1], [0], [0], [1], [0, 0, 1, 1], [], []>} : vector<2x32xf32>, vector<32x128xf32>, vector<2x128xf32> -> vector<2x128xf32>
    %76 = arith.addf %74, %75 : vector<2x128xf32>
    %77 = math.tanh %76 : vector<2x128xf32>
    %78 = arith.negf %76 : vector<2x128xf32>
    %79 = math.exp %78 : vector<2x128xf32>
    %cst_39 = arith.constant 1.000000e+00 : f32
    %80 = vector.broadcast %cst_39 : f32 to vector<2x128xf32>
    %81 = arith.addf %80, %79 : vector<2x128xf32>
    %82 = arith.divf %80, %81 : vector<2x128xf32>
    %83 = arith.select %53, %77, %82 : vector<2x128xi1>, vector<2x128xf32>
    %84 = vector.extract_strided_slice %83 {offsets = [0, 0], sizes = [2, 32], strides = [1, 1]} : vector<2x128xf32> to vector<2x32xf32>
    %85 = vector.extract_strided_slice %83 {offsets = [0, 32], sizes = [2, 32], strides = [1, 1]} : vector<2x128xf32> to vector<2x32xf32>
    %86 = vector.extract_strided_slice %83 {offsets = [0, 64], sizes = [2, 32], strides = [1, 1]} : vector<2x128xf32> to vector<2x32xf32>
    %87 = vector.extract_strided_slice %83 {offsets = [0, 96], sizes = [2, 32], strides = [1, 1]} : vector<2x128xf32> to vector<2x32xf32>
    %88 = arith.mulf %85, %69 : vector<2x32xf32>
    %89 = arith.mulf %84, %86 : vector<2x32xf32>
    %90 = arith.addf %88, %89 : vector<2x32xf32>
    %91 = math.tanh %90 : vector<2x32xf32>
    %92 = arith.mulf %87, %91 : vector<2x32xf32>
    %c0_40 = arith.constant 0 : index
    %c0_41 = arith.constant 0 : index
    %93 = vector.load %arg7[%c0_40, %c0_41] : memref<56x32xf32, #tpu.memory_space<vmem>>, vector<2x32xf32>
    tpu.vector_store %arg7[%c0_40, %c0_41], %92 {strides = array<i32>} : memref<56x32xf32, #tpu.memory_space<vmem>>, vector<2x32xf32>,
    %94 = vector.extract_strided_slice %47 {offsets = [16, 0], sizes = [2, 128], strides = [1, 1]} : vector<64x128xf32> to vector<2x128xf32>
    %cst_42 = arith.constant dense<0.000000e+00> : vector<2x128xf32>
    %95 = tpu.matmul %92, %6, %cst_42 {dimension_numbers = #tpu.dot_dimension_numbers<[1], [0], [0], [1], [0, 0, 1, 1], [], []>} : vector<2x32xf32>, vector<32x128xf32>, vector<2x128xf32> -> vector<2x128xf32>
    %96 = arith.addf %94, %95 : vector<2x128xf32>
    %97 = math.tanh %96 : vector<2x128xf32>
    %98 = arith.negf %96 : vector<2x128xf32>
    %99 = math.exp %98 : vector<2x128xf32>
    %cst_43 = arith.constant 1.000000e+00 : f32
    %100 = vector.broadcast %cst_43 : f32 to vector<2x128xf32>
    %101 = arith.addf %100, %99 : vector<2x128xf32>
    %102 = arith.divf %100, %101 : vector<2x128xf32>
    %103 = arith.select %53, %97, %102 : vector<2x128xi1>, vector<2x128xf32>
    %104 = vector.extract_strided_slice %103 {offsets = [0, 0], sizes = [2, 32], strides = [1, 1]} : vector<2x128xf32> to vector<2x32xf32>
    %105 = vector.extract_strided_slice %103 {offsets = [0, 32], sizes = [2, 32], strides = [1, 1]} : vector<2x128xf32> to vector<2x32xf32>
    %106 = vector.extract_strided_slice %103 {offsets = [0, 64], sizes = [2, 32], strides = [1, 1]} : vector<2x128xf32> to vector<2x32xf32>
    %107 = vector.extract_strided_slice %103 {offsets = [0, 96], sizes = [2, 32], strides = [1, 1]} : vector<2x128xf32> to vector<2x32xf32>
    %108 = arith.mulf %105, %90 : vector<2x32xf32>
    %109 = arith.mulf %104, %106 : vector<2x32xf32>
    %110 = arith.addf %108, %109 : vector<2x32xf32>
    %111 = math.tanh %110 : vector<2x32xf32>
    %112 = arith.mulf %107, %111 : vector<2x32xf32>
    %c8 = arith.constant 8 : index
    %c0_44 = arith.constant 0 : index
    %113 = vector.load %arg7[%c8, %c0_44] : memref<56x32xf32, #tpu.memory_space<vmem>>, vector<2x32xf32>
    tpu.vector_store %arg7[%c8, %c0_44], %112 {strides = array<i32>} : memref<56x32xf32, #tpu.memory_space<vmem>>, vector<2x32xf32>,
    %114 = vector.extract_strided_slice %47 {offsets = [24, 0], sizes = [2, 128], strides = [1, 1]} : vector<64x128xf32> to vector<2x128xf32>
    %cst_45 = arith.constant dense<0.000000e+00> : vector<2x128xf32>
    %115 = tpu.matmul %112, %6, %cst_45 {dimension_numbers = #tpu.dot_dimension_numbers<[1], [0], [0], [1], [0, 0, 1, 1], [], []>} : vector<2x32xf32>, vector<32x128xf32>, vector<2x128xf32> -> vector<2x128xf32>
    %116 = arith.addf %114, %115 : vector<2x128xf32>
    %117 = math.tanh %116 : vector<2x128xf32>
    %118 = arith.negf %116 : vector<2x128xf32>
    %119 = math.exp %118 : vector<2x128xf32>
    %cst_46 = arith.constant 1.000000e+00 : f32
    %120 = vector.broadcast %cst_46 : f32 to vector<2x128xf32>
    %121 = arith.addf %120, %119 : vector<2x128xf32>
    %122 = arith.divf %120, %121 : vector<2x128xf32>
    %123 = arith.select %53, %117, %122 : vector<2x128xi1>, vector<2x128xf32>
    %124 = vector.extract_strided_slice %123 {offsets = [0, 0], sizes = [2, 32], strides = [1, 1]} : vector<2x128xf32> to vector<2x32xf32>
    %125 = vector.extract_strided_slice %123 {offsets = [0, 32], sizes = [2, 32], strides = [1, 1]} : vector<2x128xf32> to vector<2x32xf32>
    %126 = vector.extract_strided_slice %123 {offsets = [0, 64], sizes = [2, 32], strides = [1, 1]} : vector<2x128xf32> to vector<2x32xf32>
    %127 = vector.extract_strided_slice %123 {offsets = [0, 96], sizes = [2, 32], strides = [1, 1]} : vector<2x128xf32> to vector<2x32xf32>
    %128 = arith.mulf %125, %110 : vector<2x32xf32>
    %129 = arith.mulf %124, %126 : vector<2x32xf32>
    %130 = arith.addf %128, %129 : vector<2x32xf32>
    %131 = math.tanh %130 : vector<2x32xf32>
    %132 = arith.mulf %127, %131 : vector<2x32xf32>
    %c16 = arith.constant 16 : index
    %c0_47 = arith.constant 0 : index
    %133 = vector.load %arg7[%c16, %c0_47] : memref<56x32xf32, #tpu.memory_space<vmem>>, vector<2x32xf32>
    tpu.vector_store %arg7[%c16, %c0_47], %132 {strides = array<i32>} : memref<56x32xf32, #tpu.memory_space<vmem>>, vector<2x32xf32>,
    %134 = vector.extract_strided_slice %47 {offsets = [32, 0], sizes = [2, 128], strides = [1, 1]} : vector<64x128xf32> to vector<2x128xf32>
    %cst_48 = arith.constant dense<0.000000e+00> : vector<2x128xf32>
    %135 = tpu.matmul %132, %6, %cst_48 {dimension_numbers = #tpu.dot_dimension_numbers<[1], [0], [0], [1], [0, 0, 1, 1], [], []>} : vector<2x32xf32>, vector<32x128xf32>, vector<2x128xf32> -> vector<2x128xf32>
    %136 = arith.addf %134, %135 : vector<2x128xf32>
    %137 = math.tanh %136 : vector<2x128xf32>
    %138 = arith.negf %136 : vector<2x128xf32>
    %139 = math.exp %138 : vector<2x128xf32>
    %cst_49 = arith.constant 1.000000e+00 : f32
    %140 = vector.broadcast %cst_49 : f32 to vector<2x128xf32>
    %141 = arith.addf %140, %139 : vector<2x128xf32>
    %142 = arith.divf %140, %141 : vector<2x128xf32>
    %143 = arith.select %53, %137, %142 : vector<2x128xi1>, vector<2x128xf32>
    %144 = vector.extract_strided_slice %143 {offsets = [0, 0], sizes = [2, 32], strides = [1, 1]} : vector<2x128xf32> to vector<2x32xf32>
    %145 = vector.extract_strided_slice %143 {offsets = [0, 32], sizes = [2, 32], strides = [1, 1]} : vector<2x128xf32> to vector<2x32xf32>
    %146 = vector.extract_strided_slice %143 {offsets = [0, 64], sizes = [2, 32], strides = [1, 1]} : vector<2x128xf32> to vector<2x32xf32>
    %147 = vector.extract_strided_slice %143 {offsets = [0, 96], sizes = [2, 32], strides = [1, 1]} : vector<2x128xf32> to vector<2x32xf32>
    %148 = arith.mulf %145, %130 : vector<2x32xf32>
    %149 = arith.mulf %144, %146 : vector<2x32xf32>
    %150 = arith.addf %148, %149 : vector<2x32xf32>
    %151 = math.tanh %150 : vector<2x32xf32>
    %152 = arith.mulf %147, %151 : vector<2x32xf32>
    %c24 = arith.constant 24 : index
    %c0_50 = arith.constant 0 : index
    %153 = vector.load %arg7[%c24, %c0_50] : memref<56x32xf32, #tpu.memory_space<vmem>>, vector<2x32xf32>
    tpu.vector_store %arg7[%c24, %c0_50], %152 {strides = array<i32>} : memref<56x32xf32, #tpu.memory_space<vmem>>, vector<2x32xf32>,
    %154 = vector.extract_strided_slice %47 {offsets = [40, 0], sizes = [2, 128], strides = [1, 1]} : vector<64x128xf32> to vector<2x128xf32>
    %cst_51 = arith.constant dense<0.000000e+00> : vector<2x128xf32>
    %155 = tpu.matmul %152, %6, %cst_51 {dimension_numbers = #tpu.dot_dimension_numbers<[1], [0], [0], [1], [0, 0, 1, 1], [], []>} : vector<2x32xf32>, vector<32x128xf32>, vector<2x128xf32> -> vector<2x128xf32>
    %156 = arith.addf %154, %155 : vector<2x128xf32>
    %157 = math.tanh %156 : vector<2x128xf32>
    %158 = arith.negf %156 : vector<2x128xf32>
    %159 = math.exp %158 : vector<2x128xf32>
    %cst_52 = arith.constant 1.000000e+00 : f32
    %160 = vector.broadcast %cst_52 : f32 to vector<2x128xf32>
    %161 = arith.addf %160, %159 : vector<2x128xf32>
    %162 = arith.divf %160, %161 : vector<2x128xf32>
    %163 = arith.select %53, %157, %162 : vector<2x128xi1>, vector<2x128xf32>
    %164 = vector.extract_strided_slice %163 {offsets = [0, 0], sizes = [2, 32], strides = [1, 1]} : vector<2x128xf32> to vector<2x32xf32>
    %165 = vector.extract_strided_slice %163 {offsets = [0, 32], sizes = [2, 32], strides = [1, 1]} : vector<2x128xf32> to vector<2x32xf32>
    %166 = vector.extract_strided_slice %163 {offsets = [0, 64], sizes = [2, 32], strides = [1, 1]} : vector<2x128xf32> to vector<2x32xf32>
    %167 = vector.extract_strided_slice %163 {offsets = [0, 96], sizes = [2, 32], strides = [1, 1]} : vector<2x128xf32> to vector<2x32xf32>
    %168 = arith.mulf %165, %150 : vector<2x32xf32>
    %169 = arith.mulf %164, %166 : vector<2x32xf32>
    %170 = arith.addf %168, %169 : vector<2x32xf32>
    %171 = math.tanh %170 : vector<2x32xf32>
    %172 = arith.mulf %167, %171 : vector<2x32xf32>
    %c32_53 = arith.constant 32 : index
    %c0_54 = arith.constant 0 : index
    %173 = vector.load %arg7[%c32_53, %c0_54] : memref<56x32xf32, #tpu.memory_space<vmem>>, vector<2x32xf32>
    tpu.vector_store %arg7[%c32_53, %c0_54], %172 {strides = array<i32>} : memref<56x32xf32, #tpu.memory_space<vmem>>, vector<2x32xf32>,
    %174 = vector.extract_strided_slice %47 {offsets = [48, 0], sizes = [2, 128], strides = [1, 1]} : vector<64x128xf32> to vector<2x128xf32>
    %cst_55 = arith.constant dense<0.000000e+00> : vector<2x128xf32>
    %175 = tpu.matmul %172, %6, %cst_55 {dimension_numbers = #tpu.dot_dimension_numbers<[1], [0], [0], [1], [0, 0, 1, 1], [], []>} : vector<2x32xf32>, vector<32x128xf32>, vector<2x128xf32> -> vector<2x128xf32>
    %176 = arith.addf %174, %175 : vector<2x128xf32>
    %177 = math.tanh %176 : vector<2x128xf32>
    %178 = arith.negf %176 : vector<2x128xf32>
    %179 = math.exp %178 : vector<2x128xf32>
    %cst_56 = arith.constant 1.000000e+00 : f32
    %180 = vector.broadcast %cst_56 : f32 to vector<2x128xf32>
    %181 = arith.addf %180, %179 : vector<2x128xf32>
    %182 = arith.divf %180, %181 : vector<2x128xf32>
    %183 = arith.select %53, %177, %182 : vector<2x128xi1>, vector<2x128xf32>
    %184 = vector.extract_strided_slice %183 {offsets = [0, 0], sizes = [2, 32], strides = [1, 1]} : vector<2x128xf32> to vector<2x32xf32>
    %185 = vector.extract_strided_slice %183 {offsets = [0, 32], sizes = [2, 32], strides = [1, 1]} : vector<2x128xf32> to vector<2x32xf32>
    %186 = vector.extract_strided_slice %183 {offsets = [0, 64], sizes = [2, 32], strides = [1, 1]} : vector<2x128xf32> to vector<2x32xf32>
    %187 = vector.extract_strided_slice %183 {offsets = [0, 96], sizes = [2, 32], strides = [1, 1]} : vector<2x128xf32> to vector<2x32xf32>
    %188 = arith.mulf %185, %170 : vector<2x32xf32>
    %189 = arith.mulf %184, %186 : vector<2x32xf32>
    %190 = arith.addf %188, %189 : vector<2x32xf32>
    %191 = math.tanh %190 : vector<2x32xf32>
    %192 = arith.mulf %187, %191 : vector<2x32xf32>
    %c40 = arith.constant 40 : index
    %c0_57 = arith.constant 0 : index
    %193 = vector.load %arg7[%c40, %c0_57] : memref<56x32xf32, #tpu.memory_space<vmem>>, vector<2x32xf32>
    tpu.vector_store %arg7[%c40, %c0_57], %192 {strides = array<i32>} : memref<56x32xf32, #tpu.memory_space<vmem>>, vector<2x32xf32>,
    %194 = vector.extract_strided_slice %47 {offsets = [56, 0], sizes = [2, 128], strides = [1, 1]} : vector<64x128xf32> to vector<2x128xf32>
    %cst_58 = arith.constant dense<0.000000e+00> : vector<2x128xf32>
    %195 = tpu.matmul %192, %6, %cst_58 {dimension_numbers = #tpu.dot_dimension_numbers<[1], [0], [0], [1], [0, 0, 1, 1], [], []>} : vector<2x32xf32>, vector<32x128xf32>, vector<2x128xf32> -> vector<2x128xf32>
    %196 = arith.addf %194, %195 : vector<2x128xf32>
    %197 = math.tanh %196 : vector<2x128xf32>
    %198 = arith.negf %196 : vector<2x128xf32>
    %199 = math.exp %198 : vector<2x128xf32>
    %cst_59 = arith.constant 1.000000e+00 : f32
    %200 = vector.broadcast %cst_59 : f32 to vector<2x128xf32>
    %201 = arith.addf %200, %199 : vector<2x128xf32>
    %202 = arith.divf %200, %201 : vector<2x128xf32>
    %203 = arith.select %53, %197, %202 : vector<2x128xi1>, vector<2x128xf32>
    %204 = vector.extract_strided_slice %203 {offsets = [0, 0], sizes = [2, 32], strides = [1, 1]} : vector<2x128xf32> to vector<2x32xf32>
    %205 = vector.extract_strided_slice %203 {offsets = [0, 32], sizes = [2, 32], strides = [1, 1]} : vector<2x128xf32> to vector<2x32xf32>
    %206 = vector.extract_strided_slice %203 {offsets = [0, 64], sizes = [2, 32], strides = [1, 1]} : vector<2x128xf32> to vector<2x32xf32>
    %207 = vector.extract_strided_slice %203 {offsets = [0, 96], sizes = [2, 32], strides = [1, 1]} : vector<2x128xf32> to vector<2x32xf32>
    %208 = arith.mulf %205, %190 : vector<2x32xf32>
    %209 = arith.mulf %204, %206 : vector<2x32xf32>
    %210 = arith.addf %208, %209 : vector<2x32xf32>
    %211 = math.tanh %210 : vector<2x32xf32>
    %212 = arith.mulf %207, %211 : vector<2x32xf32>
    %c48 = arith.constant 48 : index
    %c0_60 = arith.constant 0 : index
    %213 = vector.load %arg7[%c48, %c0_60] : memref<56x32xf32, #tpu.memory_space<vmem>>, vector<2x32xf32>
    tpu.vector_store %arg7[%c48, %c0_60], %212 {strides = array<i32>} : memref<56x32xf32, #tpu.memory_space<vmem>>, vector<2x32xf32>,
    %c0_61 = arith.constant 0 : index
    %c0_62 = arith.constant 0 : index
    %214 = vector.load %arg7[%c0_61, %c0_62] : memref<56x32xf32, #tpu.memory_space<vmem>>, vector<56x32xf32>
    %cst_63 = arith.constant dense<0.000000e+00> : vector<56x128xf32>
    %215 = tpu.matmul %214, %7, %cst_63 {dimension_numbers = #tpu.dot_dimension_numbers<[1], [0], [0], [1], [0, 0, 1, 1], [], []>} : vector<56x32xf32>, vector<32x128xf32>, vector<56x128xf32> -> vector<56x128xf32>
    %216 = vector.broadcast %9 : vector<1x128xf32> to vector<56x128xf32>
    %217 = arith.addf %215, %216 : vector<56x128xf32>
    %c0_64 = arith.constant 0 : index
    %c0_65 = arith.constant 0 : index
    %218 = vector.load %arg5[%c0_64, %c0_65] : memref<56x128xf32, #tpu.memory_space<vmem>>, vector<56x128xf32>
    tpu.vector_store %arg5[%c0_64, %c0_65], %217 {strides = array<i32>} : memref<56x128xf32, #tpu.memory_space<vmem>>, vector<56x128xf32>,
    return
  }
  func.func @transform_0(%arg0: i32) -> (i32, i32) {
    %c0_i32 = arith.constant 0 : i32
    %c0_i32_0 = arith.constant 0 : i32
    %c0_i32_1 = arith.constant 0 : i32
    return %c0_i32, %c0_i32_0 : i32, i32
  }
  func.func @transform_1(%arg0: i32) -> (i32, i32) {
    %c0_i32 = arith.constant 0 : i32
    %c0_i32_0 = arith.constant 0 : i32
    %c0_i32_1 = arith.constant 0 : i32
    return %c0_i32, %c0_i32_0 : i32, i32
  }
  func.func @transform_2(%arg0: i32) -> (i32, i32) {
    %c0_i32 = arith.constant 0 : i32
    %c0_i32_0 = arith.constant 0 : i32
    %c0_i32_1 = arith.constant 0 : i32
    return %c0_i32, %c0_i32_0 : i32, i32
  }
  func.func @transform_3(%arg0: i32) -> (i32, i32) {
    %c0_i32 = arith.constant 0 : i32
    %c0_i32_0 = arith.constant 0 : i32
    %c0_i32_1 = arith.constant 0 : i32
    return %c0_i32, %c0_i32_0 : i32, i32
  }
  func.func @transform_4(%arg0: i32) -> (i32, i32) {
    %c0_i32 = arith.constant 0 : i32
    %c0_i32_0 = arith.constant 0 : i32
    %c0_i32_1 = arith.constant 0 : i32
    return %c0_i32, %c0_i32_0 : i32, i32
  }
}

</mosaic_0001>

<llo_original>
// kernel: tpu_custom_call.1
$region0: #{tpu_custom_call.1}
  #allocation0 [shape = 'u32[]', space=smem, size = 0x4, offset = 0x4, fixed_abs, tag = 'smem constant byte address 0x4 - core index']
  #allocation1 [shape = 'u32[72,128]{1,0:T(1,128)}', space=vmem, size = 0x9000, scoped, tag = 'internal scratch']
  #allocation2 [shape = 'f32[64,32]{1,0:T(8,128)}', space=vmem, size = 0x8000, scoped, tag = 'scratch operand']
  #allocation3 [shape = 'f32[56,32]{1,0:T(8,128)}', space=vmem, size = 0x7000, scoped, tag = 'scratch operand']
  %s0 = inlined_call_operand.vmem [shape: f32[512,32], index: 0, kind: input, shape index: {}]
  %s1 = inlined_call_operand.vmem [shape: f32[72,32], index: 1, kind: input, shape index: {}]
  %s2 = inlined_call_operand.vmem [shape: f32[64,32], index: 2, kind: input, shape index: {}]
  %s3 = inlined_call_operand.vmem [shape: f32[112,128], index: 3, kind: input, shape index: {}]
  %s4 = inlined_call_operand.hbm [shape: f32[56,128], index: 4, kind: output, shape index: {}]
  %s5 = sld [smem:[#allocation0]]
  $region26: #{tpu_custom_call.1} parent=0
    _
  %s7 = ssub.s32 1, %s5
  %s8 = scalar_select 0, %s7, %s5
  $region1: #{tpu_custom_call.1} parent=0
    #allocation4 [shape = 'u8[28672]{0}', space=vmem, size = 0x7000, scoped, tag = 'output window, operand 0, single buffered']
    #allocation5 [shape = 's32[1]{0}', space=sflag, size = 0x4, scoped, tag = 'scoped memory for tpu_custom_call.1']
    %9 = vsyncpa [#allocation5], 0
    // Predicated region
    $region2: #{tpu_custom_call.1} parent=1 // pred_check
      _
    $region3: #{tpu_custom_call.1} parent=1 // pred_check_branch
      %11 = sbr.rel (0) target = $region5
    $region4: #{tpu_custom_call.1} parent=1 // pred_region
      _
    $region5: #{tpu_custom_call.1} parent=1 // pred_fallthru
      _
    // Predicated region
    $region6: #{tpu_custom_call.1} parent=1 // pred_check
      _
    $region7: #{tpu_custom_call.1} parent=1 // pred_check_branch
      %13 = sbr.rel (0) target = $region9
    $region8: #{tpu_custom_call.1} parent=1 // pred_region
      _
    $region9: #{tpu_custom_call.1} parent=1 // pred_fallthru
      _
    // Predicated region
    $region10: #{tpu_custom_call.1} parent=1 // pred_check
      _
    $region11: #{tpu_custom_call.1} parent=1 // pred_check_branch
      %15 = sbr.rel (0) target = $region13
    $region12: #{tpu_custom_call.1} parent=1 // pred_region
      _
    $region13: #{tpu_custom_call.1} parent=1 // pred_fallthru
      _
    // Predicated region
    $region14: #{tpu_custom_call.1} parent=1 // pred_check
      _
    $region15: #{tpu_custom_call.1} parent=1 // pred_check_branch
      %17 = sbr.rel (0) target = $region17
    $region16: #{tpu_custom_call.1} parent=1 // pred_region
      _
    $region17: #{tpu_custom_call.1} parent=1 // pred_fallthru
      _
    %v18 = vld [vmem:[%s1] sm:$0xff]
    %v19 = vld [vmem:[%s1 + $0x8] sm:$0xff]
    %v20 = vld [vmem:[%s1 + $0x10] sm:$0xff]
    %v21 = vld [vmem:[%s1 + $0x18] sm:$0xff]
    %v22 = vld [vmem:[%s1 + $0x20] sm:$0xff]
    %v23 = vld [vmem:[%s1 + $0x28] sm:$0xff]
    %v24 = vld [vmem:[%s1 + $0x30] sm:$0xff]
    %v25 = vld [vmem:[%s1 + $0x38] sm:$0xff]
    %v26 = vld [vmem:[%s1 + $0x40] sm:$0x1]
    %v27 = vld [vmem:[%s1 + $0x41] sm:$0x1]
    %v28 = vld [vmem:[%s1 + $0x42] sm:$0x1]
    %v29 = vld [vmem:[%s3] sm:$0xff]
    %v30 = vld [vmem:[%s3 + $0x8] sm:$0xff]
    %v31 = vld [vmem:[%s3 + $0x10] sm:$0xff]
    %v32 = vld [vmem:[%s3 + $0x18] sm:$0xff]
    %v33 = vld [vmem:[%s3 + $0x20] sm:$0xff]
    %v34 = vld [vmem:[%s3 + $0x28] sm:$0xff]
    %v35 = vld [vmem:[%s3 + $0x30] sm:$0xff]
    %v36 = vld [vmem:[%s3 + $0x38] sm:$0xff]
    %v37 = vld [vmem:[%s3 + $0x40] sm:$0xff]
    %v38 = vld [vmem:[%s3 + $0x48] sm:$0xff]
    %v39 = vld [vmem:[%s3 + $0x50] sm:$0xff]
    %v40 = vld [vmem:[%s3 + $0x58] sm:$0xff]
    %v41 = vld [vmem:[%s3 + $0x60] sm:$0x1]
    %v42 = vld [vmem:[%s3 + $0x68] sm:$0x1]
    %v43 = vld [vmem:[%s0] sm:$0xff]
    %v44 = vld [vmem:[%s0 + $0x8] sm:$0xff]
    %v45 = vld [vmem:[%s0 + $0x10] sm:$0xff]
    %v46 = vld [vmem:[%s0 + $0x18] sm:$0xff]
    %v47 = vld [vmem:[%s0 + $0x20] sm:$0xff]
    %v48 = vld [vmem:[%s0 + $0x28] sm:$0xff]
    %v49 = vld [vmem:[%s0 + $0x30] sm:$0xff]
    %v50 = vld [vmem:[%s0 + $0x38] sm:$0xff]
    %v51 = vld [vmem:[%s0 + $0x40] sm:$0xff]
    %v52 = vld [vmem:[%s0 + $0x48] sm:$0xff]
    %v53 = vld [vmem:[%s0 + $0x50] sm:$0xff]
    %v54 = vld [vmem:[%s0 + $0x58] sm:$0xff]
    %v55 = vld [vmem:[%s0 + $0x60] sm:$0xff]
    %v56 = vld [vmem:[%s0 + $0x68] sm:$0xff]
    %v57 = vld [vmem:[%s0 + $0x70] sm:$0xff]
    %v58 = vld [vmem:[%s0 + $0x78] sm:$0xff]
    %v59 = vld [vmem:[%s0 + $0x80] sm:$0xff]
    %v60 = vld [vmem:[%s0 + $0x88] sm:$0xff]
    %v61 = vld [vmem:[%s0 + $0x90] sm:$0xff]
    %v62 = vld [vmem:[%s0 + $0x98] sm:$0xff]
    %v63 = vld [vmem:[%s0 + $0xa0] sm:$0xff]
    %v64 = vld [vmem:[%s0 + $0xa8] sm:$0xff]
    %v65 = vld [vmem:[%s0 + $0xb0] sm:$0xff]
    %v66 = vld [vmem:[%s0 + $0xb8] sm:$0xff]
    %v67 = vld [vmem:[%s0 + $0xc0] sm:$0xff]
    %v68 = vld [vmem:[%s0 + $0xc8] sm:$0xff]
    %v69 = vld [vmem:[%s0 + $0xd0] sm:$0xff]
    %v70 = vld [vmem:[%s0 + $0xd8] sm:$0xff]
    %v71 = vld [vmem:[%s0 + $0xe0] sm:$0xff]
    %v72 = vld [vmem:[%s0 + $0xe8] sm:$0xff]
    %v73 = vld [vmem:[%s0 + $0xf0] sm:$0xff]
    %v74 = vld [vmem:[%s0 + $0xf8] sm:$0xff]
    %v75 = vld [vmem:[%s0 + $0x100] sm:$0xff]
    %v76 = vld [vmem:[%s0 + $0x108] sm:$0xff]
    %v77 = vld [vmem:[%s0 + $0x110] sm:$0xff]
    %v78 = vld [vmem:[%s0 + $0x118] sm:$0xff]
    %v79 = vld [vmem:[%s0 + $0x120] sm:$0xff]
    %v80 = vld [vmem:[%s0 + $0x128] sm:$0xff]
    %v81 = vld [vmem:[%s0 + $0x130] sm:$0xff]
    %v82 = vld [vmem:[%s0 + $0x138] sm:$0xff]
    %v83 = vld [vmem:[%s0 + $0x140] sm:$0xff]
    %v84 = vld [vmem:[%s0 + $0x148] sm:$0xff]
    %v85 = vld [vmem:[%s0 + $0x150] sm:$0xff]
    %v86 = vld [vmem:[%s0 + $0x158] sm:$0xff]
    %v87 = vld [vmem:[%s0 + $0x160] sm:$0xff]
    %v88 = vld [vmem:[%s0 + $0x168] sm:$0xff]
    %v89 = vld [vmem:[%s0 + $0x170] sm:$0xff]
    %v90 = vld [vmem:[%s0 + $0x178] sm:$0xff]
    %v91 = vld [vmem:[%s0 + $0x180] sm:$0xff]
    %v92 = vld [vmem:[%s0 + $0x188] sm:$0xff]
    %v93 = vld [vmem:[%s0 + $0x190] sm:$0xff]
    %v94 = vld [vmem:[%s0 + $0x198] sm:$0xff]
    %v95 = vld [vmem:[%s0 + $0x1a0] sm:$0xff]
    %v96 = vld [vmem:[%s0 + $0x1a8] sm:$0xff]
    %v97 = vld [vmem:[%s0 + $0x1b0] sm:$0xff]
    %v98 = vld [vmem:[%s0 + $0x1b8] sm:$0xff]
    %v99 = vld [vmem:[%s0 + $0x1c0] sm:$0xff]
    %v100 = vld [vmem:[%s0 + $0x1c8] sm:$0xff]
    %v101 = vld [vmem:[%s0 + $0x1d0] sm:$0xff]
    %v102 = vld [vmem:[%s0 + $0x1d8] sm:$0xff]
    %v103 = vld [vmem:[%s0 + $0x1e0] sm:$0xff]
    %v104 = vld [vmem:[%s0 + $0x1e8] sm:$0xff]
    %v105 = vld [vmem:[%s0 + $0x1f0] sm:$0xff]
    %v106 = vld [vmem:[%s0 + $0x1f8] sm:$0xff]
    %vm107 = vcmask 261120
    %v109 = vsel %vm107, %v43, 0
    %v112 = vsel %vm107, %v44, 0
    %v115 = vsel %vm107, %v45, 0
    %v118 = vsel %vm107, %v46, 0
    %v121 = vsel %vm107, %v47, 0
    %v124 = vsel %vm107, %v48, 0
    %v127 = vsel %vm107, %v49, 0
    %v130 = vsel %vm107, %v50, 0
    %v133 = vsel %vm107, %v51, 0
    %v136 = vsel %vm107, %v52, 0
    %v139 = vsel %vm107, %v53, 0
    %v142 = vsel %vm107, %v54, 0
    %v145 = vsel %vm107, %v55, 0
    %v148 = vsel %vm107, %v56, 0
    %v151 = vsel %vm107, %v57, 0
    %v154 = vsel %vm107, %v58, 0
    %v157 = vsel %vm107, %v59, 0
    %v160 = vsel %vm107, %v60, 0
    %v163 = vsel %vm107, %v61, 0
    %v166 = vsel %vm107, %v62, 0
    %v169 = vsel %vm107, %v63, 0
    %v172 = vsel %vm107, %v64, 0
    %v175 = vsel %vm107, %v65, 0
    %v178 = vsel %vm107, %v66, 0
    %v181 = vsel %vm107, %v67, 0
    %v184 = vsel %vm107, %v68, 0
    %v187 = vsel %vm107, %v69, 0
    %v190 = vsel %vm107, %v70, 0
    %v193 = vsel %vm107, %v71, 0
    %v196 = vsel %vm107, %v72, 0
    %v199 = vsel %vm107, %v73, 0
    %v202 = vsel %vm107, %v74, 0
    %v205 = vsel %vm107, %v75, 0
    %v208 = vsel %vm107, %v76, 0
    %v211 = vsel %vm107, %v77, 0
    %v214 = vsel %vm107, %v78, 0
    %v217 = vsel %vm107, %v79, 0
    %v220 = vsel %vm107, %v80, 0
    %v223 = vsel %vm107, %v81, 0
    %v226 = vsel %vm107, %v82, 0
    %v229 = vsel %vm107, %v83, 0
    %v232 = vsel %vm107, %v84, 0
    %v235 = vsel %vm107, %v85, 0
    %v238 = vsel %vm107, %v86, 0
    %v241 = vsel %vm107, %v87, 0
    %v244 = vsel %vm107, %v88, 0
    %v247 = vsel %vm107, %v89, 0
    %v250 = vsel %vm107, %v90, 0
    %v253 = vsel %vm107, %v91, 0
    %v256 = vsel %vm107, %v92, 0
    %v259 = vsel %vm107, %v93, 0
    %v262 = vsel %vm107, %v94, 0
    %v265 = vsel %vm107, %v95, 0
    %v268 = vsel %vm107, %v96, 0
    %v271 = vsel %vm107, %v97, 0
    %v274 = vsel %vm107, %v98, 0
    %v277 = vsel %vm107, %v99, 0
    %v280 = vsel %vm107, %v100, 0
    %v283 = vsel %vm107, %v101, 0
    %v286 = vsel %vm107, %v102, 0
    %v289 = vsel %vm107, %v103, 0
    %v292 = vsel %vm107, %v104, 0
    %v295 = vsel %vm107, %v105, 0
    %v298 = vsel %vm107, %v106, 0
    %300 = vmatpush.msra.mxu0 0.0
    %301 = vmatpush.msra.mxu0 0.0
    %302 = vmatpush.msra.mxu0 0.0
    %303 = vmatpush.msra.mxu0 0.0
    %304 = vmatpush.msra.mxu0 0.0
    %305 = vmatpush.msra.mxu0 0.0
    %306 = vmatpush.msra.mxu0 0.0
    %307 = vmatpush.msra.mxu0 0.0
    %308 = vmatpush.msra.mxu0 0.0
    %309 = vmatpush.msra.mxu0 0.0
    %310 = vmatpush.msra.mxu0 0.0
    %311 = vmatpush.msra.mxu0 0.0
    %312 = vmatpush.msra.mxu0 %v21
    %313 = vmatpush.msra.mxu0 %v20
    %314 = vmatpush.msra.mxu0 %v19
    %315 = vmatpush.msra.mxu0 %v18
    %316 = vmatmul.f32.gmra.mxu0 %v109
    %v317 = vpop.f32.mrf.mxu0
    %v318 = vadd.f32 0.0, %v317
    %319 = vmatmul.f32.gmra.mxu0 %v112
    %v320 = vpop.f32.mrf.mxu0
    %v321 = vadd.f32 0.0, %v320
    %322 = vmatmul.f32.gmra.mxu0 %v115
    %v323 = vpop.f32.mrf.mxu0
    %v324 = vadd.f32 0.0, %v323
    %325 = vmatmul.f32.gmra.mxu0 %v118
    %v326 = vpop.f32.mrf.mxu0
    %v327 = vadd.f32 0.0, %v326
    %328 = vmatmul.f32.gmra.mxu0 %v121
    %v329 = vpop.f32.mrf.mxu0
    %v330 = vadd.f32 0.0, %v329
    %331 = vmatmul.f32.gmra.mxu0 %v124
    %v332 = vpop.f32.mrf.mxu0
    %v333 = vadd.f32 0.0, %v332
    %334 = vmatmul.f32.gmra.mxu0 %v127
    %v335 = vpop.f32.mrf.mxu0
    %v336 = vadd.f32 0.0, %v335
    %337 = vmatmul.f32.gmra.mxu0 %v130
    %v338 = vpop.f32.mrf.mxu0
    %v339 = vadd.f32 0.0, %v338
    %340 = vmatmul.f32.gmra.mxu0 %v133
    %v341 = vpop.f32.mrf.mxu0
    %v342 = vadd.f32 0.0, %v341
    %343 = vmatmul.f32.gmra.mxu0 %v136
    %v344 = vpop.f32.mrf.mxu0
    %v345 = vadd.f32 0.0, %v344
    %346 = vmatmul.f32.gmra.mxu0 %v139
    %v347 = vpop.f32.mrf.mxu0
    %v348 = vadd.f32 0.0, %v347
    %349 = vmatmul.f32.gmra.mxu0 %v142
    %v350 = vpop.f32.mrf.mxu0
    %v351 = vadd.f32 0.0, %v350
    %352 = vmatmul.f32.gmra.mxu0 %v145
    %v353 = vpop.f32.mrf.mxu0
    %v354 = vadd.f32 0.0, %v353
    %355 = vmatmul.f32.gmra.mxu0 %v148
    %v356 = vpop.f32.mrf.mxu0
    %v357 = vadd.f32 0.0, %v356
    %358 = vmatmul.f32.gmra.mxu0 %v151
    %v359 = vpop.f32.mrf.mxu0
    %v360 = vadd.f32 0.0, %v359
    %361 = vmatmul.f32.gmra.mxu0 %v154
    %v362 = vpop.f32.mrf.mxu0
    %v363 = vadd.f32 0.0, %v362
    %364 = vmatmul.f32.gmra.mxu0 %v157
    %v365 = vpop.f32.mrf.mxu0
    %v366 = vadd.f32 0.0, %v365
    %367 = vmatmul.f32.gmra.mxu0 %v160
    %v368 = vpop.f32.mrf.mxu0
    %v369 = vadd.f32 0.0, %v368
    %370 = vmatmul.f32.gmra.mxu0 %v163
    %v371 = vpop.f32.mrf.mxu0
    %v372 = vadd.f32 0.0, %v371
    %373 = vmatmul.f32.gmra.mxu0 %v166
    %v374 = vpop.f32.mrf.mxu0
    %v375 = vadd.f32 0.0, %v374
    %376 = vmatmul.f32.gmra.mxu0 %v169
    %v377 = vpop.f32.mrf.mxu0
    %v378 = vadd.f32 0.0, %v377
    %379 = vmatmul.f32.gmra.mxu0 %v172
    %v380 = vpop.f32.mrf.mxu0
    %v381 = vadd.f32 0.0, %v380
    %382 = vmatmul.f32.gmra.mxu0 %v175
    %v383 = vpop.f32.mrf.mxu0
    %v384 = vadd.f32 0.0, %v383
    %385 = vmatmul.f32.gmra.mxu0 %v178
    %v386 = vpop.f32.mrf.mxu0
    %v387 = vadd.f32 0.0, %v386
    %388 = vmatmul.f32.gmra.mxu0 %v181
    %v389 = vpop.f32.mrf.mxu0
    %v390 = vadd.f32 0.0, %v389
    %391 = vmatmul.f32.gmra.mxu0 %v184
    %v392 = vpop.f32.mrf.mxu0
    %v393 = vadd.f32 0.0, %v392
    %394 = vmatmul.f32.gmra.mxu0 %v187
    %v395 = vpop.f32.mrf.mxu0
    %v396 = vadd.f32 0.0, %v395
    %397 = vmatmul.f32.gmra.mxu0 %v190
    %v398 = vpop.f32.mrf.mxu0
    %v399 = vadd.f32 0.0, %v398
    %400 = vmatmul.f32.gmra.mxu0 %v193
    %v401 = vpop.f32.mrf.mxu0
    %v402 = vadd.f32 0.0, %v401
    %403 = vmatmul.f32.gmra.mxu0 %v196
    %v404 = vpop.f32.mrf.mxu0
    %v405 = vadd.f32 0.0, %v404
    %406 = vmatmul.f32.gmra.mxu0 %v199
    %v407 = vpop.f32.mrf.mxu0
    %v408 = vadd.f32 0.0, %v407
    %409 = vmatmul.f32.gmra.mxu0 %v202
    %v410 = vpop.f32.mrf.mxu0
    %v411 = vadd.f32 0.0, %v410
    %412 = vmatmul.f32.gmra.mxu0 %v205
    %v413 = vpop.f32.mrf.mxu0
    %v414 = vadd.f32 0.0, %v413
    %415 = vmatmul.f32.gmra.mxu0 %v208
    %v416 = vpop.f32.mrf.mxu0
    %v417 = vadd.f32 0.0, %v416
    %418 = vmatmul.f32.gmra.mxu0 %v211
    %v419 = vpop.f32.mrf.mxu0
    %v420 = vadd.f32 0.0, %v419
    %421 = vmatmul.f32.gmra.mxu0 %v214
    %v422 = vpop.f32.mrf.mxu0
    %v423 = vadd.f32 0.0, %v422
    %424 = vmatmul.f32.gmra.mxu0 %v217
    %v425 = vpop.f32.mrf.mxu0
    %v426 = vadd.f32 0.0, %v425
    %427 = vmatmul.f32.gmra.mxu0 %v220
    %v428 = vpop.f32.mrf.mxu0
    %v429 = vadd.f32 0.0, %v428
    %430 = vmatmul.f32.gmra.mxu0 %v223
    %v431 = vpop.f32.mrf.mxu0
    %v432 = vadd.f32 0.0, %v431
    %433 = vmatmul.f32.gmra.mxu0 %v226
    %v434 = vpop.f32.mrf.mxu0
    %v435 = vadd.f32 0.0, %v434
    %436 = vmatmul.f32.gmra.mxu0 %v229
    %v437 = vpop.f32.mrf.mxu0
    %v438 = vadd.f32 0.0, %v437
    %439 = vmatmul.f32.gmra.mxu0 %v232
    %v440 = vpop.f32.mrf.mxu0
    %v441 = vadd.f32 0.0, %v440
    %442 = vmatmul.f32.gmra.mxu0 %v235
    %v443 = vpop.f32.mrf.mxu0
    %v444 = vadd.f32 0.0, %v443
    %445 = vmatmul.f32.gmra.mxu0 %v238
    %v446 = vpop.f32.mrf.mxu0
    %v447 = vadd.f32 0.0, %v446
    %448 = vmatmul.f32.gmra.mxu0 %v241
    %v449 = vpop.f32.mrf.mxu0
    %v450 = vadd.f32 0.0, %v449
    %451 = vmatmul.f32.gmra.mxu0 %v244
    %v452 = vpop.f32.mrf.mxu0
    %v453 = vadd.f32 0.0, %v452
    %454 = vmatmul.f32.gmra.mxu0 %v247
    %v455 = vpop.f32.mrf.mxu0
    %v456 = vadd.f32 0.0, %v455
    %457 = vmatmul.f32.gmra.mxu0 %v250
    %v458 = vpop.f32.mrf.mxu0
    %v459 = vadd.f32 0.0, %v458
    %460 = vmatmul.f32.gmra.mxu0 %v253
    %v461 = vpop.f32.mrf.mxu0
    %v462 = vadd.f32 0.0, %v461
    %463 = vmatmul.f32.gmra.mxu0 %v256
    %v464 = vpop.f32.mrf.mxu0
    %v465 = vadd.f32 0.0, %v464
    %466 = vmatmul.f32.gmra.mxu0 %v259
    %v467 = vpop.f32.mrf.mxu0
    %v468 = vadd.f32 0.0, %v467
    %469 = vmatmul.f32.gmra.mxu0 %v262
    %v470 = vpop.f32.mrf.mxu0
    %v471 = vadd.f32 0.0, %v470
    %472 = vmatmul.f32.gmra.mxu0 %v265
    %v473 = vpop.f32.mrf.mxu0
    %v474 = vadd.f32 0.0, %v473
    %475 = vmatmul.f32.gmra.mxu0 %v268
    %v476 = vpop.f32.mrf.mxu0
    %v477 = vadd.f32 0.0, %v476
    %478 = vmatmul.f32.gmra.mxu0 %v271
    %v479 = vpop.f32.mrf.mxu0
    %v480 = vadd.f32 0.0, %v479
    %481 = vmatmul.f32.gmra.mxu0 %v274
    %v482 = vpop.f32.mrf.mxu0
    %v483 = vadd.f32 0.0, %v482
    %484 = vmatmul.f32.gmra.mxu0 %v277
    %v485 = vpop.f32.mrf.mxu0
    %v486 = vadd.f32 0.0, %v485
    %487 = vmatmul.f32.gmra.mxu0 %v280
    %v488 = vpop.f32.mrf.mxu0
    %v489 = vadd.f32 0.0, %v488
    %490 = vmatmul.f32.gmra.mxu0 %v283
    %v491 = vpop.f32.mrf.mxu0
    %v492 = vadd.f32 0.0, %v491
    %493 = vmatmul.f32.gmra.mxu0 %v286
    %v494 = vpop.f32.mrf.mxu0
    %v495 = vadd.f32 0.0, %v494
    %496 = vmatmul.f32.gmra.mxu0 %v289
    %v497 = vpop.f32.mrf.mxu0
    %v498 = vadd.f32 0.0, %v497
    %499 = vmatmul.f32.gmra.mxu0 %v292
    %v500 = vpop.f32.mrf.mxu0
    %v501 = vadd.f32 0.0, %v500
    %502 = vmatmul.f32.gmra.mxu0 %v295
    %v503 = vpop.f32.mrf.mxu0
    %v504 = vadd.f32 0.0, %v503
    %505 = vmatmul.f32.gmra.mxu0 %v298
    %v506 = vpop.f32.mrf.mxu0
    %v507 = vadd.f32 0.0, %v506
    %508 = vdwg.mxu0
    %v509 = vsel %vm107, %v318, 0.0
    %v510 = vsel %vm107, %v321, 0.0
    %v511 = vadd.f32 %v509, %v510
    %v512 = vsel %vm107, %v324, 0.0
    %v513 = vadd.f32 %v511, %v512
    %v514 = vsel %vm107, %v327, 0.0
    %v515 = vadd.f32 %v513, %v514
    %v516 = vsel %vm107, %v330, 0.0
    %v517 = vadd.f32 %v515, %v516
    %v518 = vsel %vm107, %v333, 0.0
    %v519 = vadd.f32 %v517, %v518
    %v520 = vsel %vm107, %v336, 0.0
    %v521 = vadd.f32 %v519, %v520
    %v522 = vsel %vm107, %v339, 0.0
    %v523 = vadd.f32 %v521, %v522
    %v524 = vsel %vm107, %v342, 0.0
    %v525 = vadd.f32 %v523, %v524
    %v526 = vsel %vm107, %v345, 0.0
    %v527 = vadd.f32 %v525, %v526
    %v528 = vsel %vm107, %v348, 0.0
    %v529 = vadd.f32 %v527, %v528
    %v530 = vsel %vm107, %v351, 0.0
    %v531 = vadd.f32 %v529, %v530
    %v532 = vsel %vm107, %v354, 0.0
    %v533 = vadd.f32 %v531, %v532
    %v534 = vsel %vm107, %v357, 0.0
    %v535 = vadd.f32 %v533, %v534
    %v536 = vsel %vm107, %v360, 0.0
    %v537 = vadd.f32 %v535, %v536
    %v538 = vsel %vm107, %v363, 0.0
    %v539 = vadd.f32 %v537, %v538
    %v540 = vsel %vm107, %v366, 0.0
    %v541 = vadd.f32 %v539, %v540
    %v542 = vsel %vm107, %v369, 0.0
    %v543 = vadd.f32 %v541, %v542
    %v544 = vsel %vm107, %v372, 0.0
    %v545 = vadd.f32 %v543, %v544
    %v546 = vsel %vm107, %v375, 0.0
    %v547 = vadd.f32 %v545, %v546
    %v548 = vsel %vm107, %v378, 0.0
    %v549 = vadd.f32 %v547, %v548
    %v550 = vsel %vm107, %v381, 0.0
    %v551 = vadd.f32 %v549, %v550
    %v552 = vsel %vm107, %v384, 0.0
    %v553 = vadd.f32 %v551, %v552
    %v554 = vsel %vm107, %v387, 0.0
    %v555 = vadd.f32 %v553, %v554
    %v556 = vsel %vm107, %v390, 0.0
    %v557 = vadd.f32 %v555, %v556
    %v558 = vsel %vm107, %v393, 0.0
    %v559 = vadd.f32 %v557, %v558
    %v560 = vsel %vm107, %v396, 0.0
    %v561 = vadd.f32 %v559, %v560
    %v562 = vsel %vm107, %v399, 0.0
    %v563 = vadd.f32 %v561, %v562
    %v564 = vsel %vm107, %v402, 0.0
    %v565 = vadd.f32 %v563, %v564
    %v566 = vsel %vm107, %v405, 0.0
    %v567 = vadd.f32 %v565, %v566
    %v568 = vsel %vm107, %v408, 0.0
    %v569 = vadd.f32 %v567, %v568
    %v570 = vsel %vm107, %v411, 0.0
    %v571 = vadd.f32 %v569, %v570
    %v572 = vsel %vm107, %v414, 0.0
    %v573 = vadd.f32 %v571, %v572
    %v574 = vsel %vm107, %v417, 0.0
    %v575 = vadd.f32 %v573, %v574
    %v576 = vsel %vm107, %v420, 0.0
    %v577 = vadd.f32 %v575, %v576
    %v578 = vsel %vm107, %v423, 0.0
    %v579 = vadd.f32 %v577, %v578
    %v580 = vsel %vm107, %v426, 0.0
    %v581 = vadd.f32 %v579, %v580
    %v582 = vsel %vm107, %v429, 0.0
    %v583 = vadd.f32 %v581, %v582
    %v584 = vsel %vm107, %v432, 0.0
    %v585 = vadd.f32 %v583, %v584
    %v586 = vsel %vm107, %v435, 0.0
    %v587 = vadd.f32 %v585, %v586
    %v588 = vsel %vm107, %v438, 0.0
    %v589 = vadd.f32 %v587, %v588
    %v590 = vsel %vm107, %v441, 0.0
    %v591 = vadd.f32 %v589, %v590
    %v592 = vsel %vm107, %v444, 0.0
    %v593 = vadd.f32 %v591, %v592
    %v594 = vsel %vm107, %v447, 0.0
    %v595 = vadd.f32 %v593, %v594
    %v596 = vsel %vm107, %v450, 0.0
    %v597 = vadd.f32 %v595, %v596
    %v598 = vsel %vm107, %v453, 0.0
    %v599 = vadd.f32 %v597, %v598
    %v600 = vsel %vm107, %v456, 0.0
    %v601 = vadd.f32 %v599, %v600
    %v602 = vsel %vm107, %v459, 0.0
    %v603 = vadd.f32 %v601, %v602
    %v604 = vsel %vm107, %v462, 0.0
    %v605 = vadd.f32 %v603, %v604
    %v606 = vsel %vm107, %v465, 0.0
    %v607 = vadd.f32 %v605, %v606
    %v608 = vsel %vm107, %v468, 0.0
    %v609 = vadd.f32 %v607, %v608
    %v610 = vsel %vm107, %v471, 0.0
    %v611 = vadd.f32 %v609, %v610
    %v612 = vsel %vm107, %v474, 0.0
    %v613 = vadd.f32 %v611, %v612
    %v614 = vsel %vm107, %v477, 0.0
    %v615 = vadd.f32 %v613, %v614
    %v616 = vsel %vm107, %v480, 0.0
    %v617 = vadd.f32 %v615, %v616
    %v618 = vsel %vm107, %v483, 0.0
    %v619 = vadd.f32 %v617, %v618
    %v620 = vsel %vm107, %v486, 0.0
    %v621 = vadd.f32 %v619, %v620
    %v622 = vsel %vm107, %v489, 0.0
    %v623 = vadd.f32 %v621, %v622
    %v624 = vsel %vm107, %v492, 0.0
    %v625 = vadd.f32 %v623, %v624
    %v626 = vsel %vm107, %v495, 0.0
    %v627 = vadd.f32 %v625, %v626
    %v628 = vsel %vm107, %v498, 0.0
    %v629 = vadd.f32 %v627, %v628
    %v630 = vsel %vm107, %v501, 0.0
    %v631 = vadd.f32 %v629, %v630
    %v632 = vsel %vm107, %v504, 0.0
    %v633 = vadd.f32 %v631, %v632
    %v634 = vsel %vm107, %v507, 0.0
    %v635 = vadd.f32 %v633, %v634
    %v636 = vrot.slane %v635, 4
    %v637 = vadd.f32 %v635, %v636
    %v638 = vrot.slane %v637, 2
    %v639 = vadd.f32 %v637, %v638
    %v640 = vrot.slane %v639, 1
    %v641 = vadd.f32 %v639, %v640
    %v642 = vrcp.pop 512.0
    %v643 = vmul.f32 512.0, %v642
    %v644 = vsub.f32 1.0, %v643
    %v645 = vmul.f32 %v642, %v644
    %v646 = vadd.f32 %v642, %v645
    %vm647 = vweird.f32 %v642
    %v648 = vsel %vm647, %v642, %v646
    %v649 = vmul.f32 %v641, %v648
    %v650 = vsub.f32 %v318, %v649
    %v651 = vsub.f32 %v321, %v649
    %v652 = vsub.f32 %v324, %v649
    %v653 = vsub.f32 %v327, %v649
    %v654 = vsub.f32 %v330, %v649
    %v655 = vsub.f32 %v333, %v649
    %v656 = vsub.f32 %v336, %v649
    %v657 = vsub.f32 %v339, %v649
    %v658 = vsub.f32 %v342, %v649
    %v659 = vsub.f32 %v345, %v649
    %v660 = vsub.f32 %v348, %v649
    %v661 = vsub.f32 %v351, %v649
    %v662 = vsub.f32 %v354, %v649
    %v663 = vsub.f32 %v357, %v649
    %v664 = vsub.f32 %v360, %v649
    %v665 = vsub.f32 %v363, %v649
    %v666 = vsub.f32 %v366, %v649
    %v667 = vsub.f32 %v369, %v649
    %v668 = vsub.f32 %v372, %v649
    %v669 = vsub.f32 %v375, %v649
    %v670 = vsub.f32 %v378, %v649
    %v671 = vsub.f32 %v381, %v649
    %v672 = vsub.f32 %v384, %v649
    %v673 = vsub.f32 %v387, %v649
    %v674 = vsub.f32 %v390, %v649
    %v675 = vsub.f32 %v393, %v649
    %v676 = vsub.f32 %v396, %v649
    %v677 = vsub.f32 %v399, %v649
    %v678 = vsub.f32 %v402, %v649
    %v679 = vsub.f32 %v405, %v649
    %v680 = vsub.f32 %v408, %v649
    %v681 = vsub.f32 %v411, %v649
    %v682 = vsub.f32 %v414, %v649
    %v683 = vsub.f32 %v417, %v649
    %v684 = vsub.f32 %v420, %v649
    %v685 = vsub.f32 %v423, %v649
    %v686 = vsub.f32 %v426, %v649
    %v687 = vsub.f32 %v429, %v649
    %v688 = vsub.f32 %v432, %v649
    %v689 = vsub.f32 %v435, %v649
    %v690 = vsub.f32 %v438, %v649
    %v691 = vsub.f32 %v441, %v649
    %v692 = vsub.f32 %v444, %v649
    %v693 = vsub.f32 %v447, %v649
    %v694 = vsub.f32 %v450, %v649
    %v695 = vsub.f32 %v453, %v649
    %v696 = vsub.f32 %v456, %v649
    %v697 = vsub.f32 %v459, %v649
    %v698 = vsub.f32 %v462, %v649
    %v699 = vsub.f32 %v465, %v649
    %v700 = vsub.f32 %v468, %v649
    %v701 = vsub.f32 %v471, %v649
    %v702 = vsub.f32 %v474, %v649
    %v703 = vsub.f32 %v477, %v649
    %v704 = vsub.f32 %v480, %v649
    %v705 = vsub.f32 %v483, %v649
    %v706 = vsub.f32 %v486, %v649
    %v707 = vsub.f32 %v489, %v649
    %v708 = vsub.f32 %v492, %v649
    %v709 = vsub.f32 %v495, %v649
    %v710 = vsub.f32 %v498, %v649
    %v711 = vsub.f32 %v501, %v649
    %v712 = vsub.f32 %v504, %v649
    %v713 = vsub.f32 %v507, %v649
    %v714 = vmul.f32 %v650, %v650
    %v715 = vmul.f32 %v651, %v651
    %v716 = vmul.f32 %v652, %v652
    %v717 = vmul.f32 %v653, %v653
    %v718 = vmul.f32 %v654, %v654
    %v719 = vmul.f32 %v655, %v655
    %v720 = vmul.f32 %v656, %v656
    %v721 = vmul.f32 %v657, %v657
    %v722 = vmul.f32 %v658, %v658
    %v723 = vmul.f32 %v659, %v659
    %v724 = vmul.f32 %v660, %v660
    %v725 = vmul.f32 %v661, %v661
    %v726 = vmul.f32 %v662, %v662
    %v727 = vmul.f32 %v663, %v663
    %v728 = vmul.f32 %v664, %v664
    %v729 = vmul.f32 %v665, %v665
    %v730 = vmul.f32 %v666, %v666
    %v731 = vmul.f32 %v667, %v667
    %v732 = vmul.f32 %v668, %v668
    %v733 = vmul.f32 %v669, %v669
    %v734 = vmul.f32 %v670, %v670
    %v735 = vmul.f32 %v671, %v671
    %v736 = vmul.f32 %v672, %v672
    %v737 = vmul.f32 %v673, %v673
    %v738 = vmul.f32 %v674, %v674
    %v739 = vmul.f32 %v675, %v675
    %v740 = vmul.f32 %v676, %v676
    %v741 = vmul.f32 %v677, %v677
    %v742 = vmul.f32 %v678, %v678
    %v743 = vmul.f32 %v679, %v679
    %v744 = vmul.f32 %v680, %v680
    %v745 = vmul.f32 %v681, %v681
    %v746 = vmul.f32 %v682, %v682
    %v747 = vmul.f32 %v683, %v683
    %v748 = vmul.f32 %v684, %v684
    %v749 = vmul.f32 %v685, %v685
    %v750 = vmul.f32 %v686, %v686
    %v751 = vmul.f32 %v687, %v687
    %v752 = vmul.f32 %v688, %v688
    %v753 = vmul.f32 %v689, %v689
    %v754 = vmul.f32 %v690, %v690
    %v755 = vmul.f32 %v691, %v691
    %v756 = vmul.f32 %v692, %v692
    %v757 = vmul.f32 %v693, %v693
    %v758 = vmul.f32 %v694, %v694
    %v759 = vmul.f32 %v695, %v695
    %v760 = vmul.f32 %v696, %v696
    %v761 = vmul.f32 %v697, %v697
    %v762 = vmul.f32 %v698, %v698
    %v763 = vmul.f32 %v699, %v699
    %v764 = vmul.f32 %v700, %v700
    %v765 = vmul.f32 %v701, %v701
    %v766 = vmul.f32 %v702, %v702
    %v767 = vmul.f32 %v703, %v703
    %v768 = vmul.f32 %v704, %v704
    %v769 = vmul.f32 %v705, %v705
    %v770 = vmul.f32 %v706, %v706
    %v771 = vmul.f32 %v707, %v707
    %v772 = vmul.f32 %v708, %v708
    %v773 = vmul.f32 %v709, %v709
    %v774 = vmul.f32 %v710, %v710
    %v775 = vmul.f32 %v711, %v711
    %v776 = vmul.f32 %v712, %v712
    %v777 = vmul.f32 %v713, %v713
    %v778 = vsel %vm107, %v714, 0.0
    %v779 = vsel %vm107, %v715, 0.0
    %v780 = vadd.f32 %v778, %v779
    %v781 = vsel %vm107, %v716, 0.0
    %v782 = vadd.f32 %v780, %v781
    %v783 = vsel %vm107, %v717, 0.0
    %v784 = vadd.f32 %v782, %v783
    %v785 = vsel %vm107, %v718, 0.0
    %v786 = vadd.f32 %v784, %v785
    %v787 = vsel %vm107, %v719, 0.0
    %v788 = vadd.f32 %v786, %v787
    %v789 = vsel %vm107, %v720, 0.0
    %v790 = vadd.f32 %v788, %v789
    %v791 = vsel %vm107, %v721, 0.0
    %v792 = vadd.f32 %v790, %v791
    %v793 = vsel %vm107, %v722, 0.0
    %v794 = vadd.f32 %v792, %v793
    %v795 = vsel %vm107, %v723, 0.0
    %v796 = vadd.f32 %v794, %v795
    %v797 = vsel %vm107, %v724, 0.0
    %v798 = vadd.f32 %v796, %v797
    %v799 = vsel %vm107, %v725, 0.0
    %v800 = vadd.f32 %v798, %v799
    %v801 = vsel %vm107, %v726, 0.0
    %v802 = vadd.f32 %v800, %v801
    %v803 = vsel %vm107, %v727, 0.0
    %v804 = vadd.f32 %v802, %v803
    %v805 = vsel %vm107, %v728, 0.0
    %v806 = vadd.f32 %v804, %v805
    %v807 = vsel %vm107, %v729, 0.0
    %v808 = vadd.f32 %v806, %v807
    %v809 = vsel %vm107, %v730, 0.0
    %v810 = vadd.f32 %v808, %v809
    %v811 = vsel %vm107, %v731, 0.0
    %v812 = vadd.f32 %v810, %v811
    %v813 = vsel %vm107, %v732, 0.0
    %v814 = vadd.f32 %v812, %v813
    %v815 = vsel %vm107, %v733, 0.0
    %v816 = vadd.f32 %v814, %v815
    %v817 = vsel %vm107, %v734, 0.0
    %v818 = vadd.f32 %v816, %v817
    %v819 = vsel %vm107, %v735, 0.0
    %v820 = vadd.f32 %v818, %v819
    %v821 = vsel %vm107, %v736, 0.0
    %v822 = vadd.f32 %v820, %v821
    %v823 = vsel %vm107, %v737, 0.0
    %v824 = vadd.f32 %v822, %v823
    %v825 = vsel %vm107, %v738, 0.0
    %v826 = vadd.f32 %v824, %v825
    %v827 = vsel %vm107, %v739, 0.0
    %v828 = vadd.f32 %v826, %v827
    %v829 = vsel %vm107, %v740, 0.0
    %v830 = vadd.f32 %v828, %v829
    %v831 = vsel %vm107, %v741, 0.0
    %v832 = vadd.f32 %v830, %v831
    %v833 = vsel %vm107, %v742, 0.0
    %v834 = vadd.f32 %v832, %v833
    %v835 = vsel %vm107, %v743, 0.0
    %v836 = vadd.f32 %v834, %v835
    %v837 = vsel %vm107, %v744, 0.0
    %v838 = vadd.f32 %v836, %v837
    %v839 = vsel %vm107, %v745, 0.0
    %v840 = vadd.f32 %v838, %v839
    %v841 = vsel %vm107, %v746, 0.0
    %v842 = vadd.f32 %v840, %v841
    %v843 = vsel %vm107, %v747, 0.0
    %v844 = vadd.f32 %v842, %v843
    %v845 = vsel %vm107, %v748, 0.0
    %v846 = vadd.f32 %v844, %v845
    %v847 = vsel %vm107, %v749, 0.0
    %v848 = vadd.f32 %v846, %v847
    %v849 = vsel %vm107, %v750, 0.0
    %v850 = vadd.f32 %v848, %v849
    %v851 = vsel %vm107, %v751, 0.0
    %v852 = vadd.f32 %v850, %v851
    %v853 = vsel %vm107, %v752, 0.0
    %v854 = vadd.f32 %v852, %v853
    %v855 = vsel %vm107, %v753, 0.0
    %v856 = vadd.f32 %v854, %v855
    %v857 = vsel %vm107, %v754, 0.0
    %v858 = vadd.f32 %v856, %v857
    %v859 = vsel %vm107, %v755, 0.0
    %v860 = vadd.f32 %v858, %v859
    %v861 = vsel %vm107, %v756, 0.0
    %v862 = vadd.f32 %v860, %v861
    %v863 = vsel %vm107, %v757, 0.0
    %v864 = vadd.f32 %v862, %v863
    %v865 = vsel %vm107, %v758, 0.0
    %v866 = vadd.f32 %v864, %v865
    %v867 = vsel %vm107, %v759, 0.0
    %v868 = vadd.f32 %v866, %v867
    %v869 = vsel %vm107, %v760, 0.0
    %v870 = vadd.f32 %v868, %v869
    %v871 = vsel %vm107, %v761, 0.0
    %v872 = vadd.f32 %v870, %v871
    %v873 = vsel %vm107, %v762, 0.0
    %v874 = vadd.f32 %v872, %v873
    %v875 = vsel %vm107, %v763, 0.0
    %v876 = vadd.f32 %v874, %v875
    %v877 = vsel %vm107, %v764, 0.0
    %v878 = vadd.f32 %v876, %v877
    %v879 = vsel %vm107, %v765, 0.0
    %v880 = vadd.f32 %v878, %v879
    %v881 = vsel %vm107, %v766, 0.0
    %v882 = vadd.f32 %v880, %v881
    %v883 = vsel %vm107, %v767, 0.0
    %v884 = vadd.f32 %v882, %v883
    %v885 = vsel %vm107, %v768, 0.0
    %v886 = vadd.f32 %v884, %v885
    %v887 = vsel %vm107, %v769, 0.0
    %v888 = vadd.f32 %v886, %v887
    %v889 = vsel %vm107, %v770, 0.0
    %v890 = vadd.f32 %v888, %v889
    %v891 = vsel %vm107, %v771, 0.0
    %v892 = vadd.f32 %v890, %v891
    %v893 = vsel %vm107, %v772, 0.0
    %v894 = vadd.f32 %v892, %v893
    %v895 = vsel %vm107, %v773, 0.0
    %v896 = vadd.f32 %v894, %v895
    %v897 = vsel %vm107, %v774, 0.0
    %v898 = vadd.f32 %v896, %v897
    %v899 = vsel %vm107, %v775, 0.0
    %v900 = vadd.f32 %v898, %v899
    %v901 = vsel %vm107, %v776, 0.0
    %v902 = vadd.f32 %v900, %v901
    %v903 = vsel %vm107, %v777, 0.0
    %v904 = vadd.f32 %v902, %v903
    %v905 = vrot.slane %v904, 4
    %v906 = vadd.f32 %v904, %v905
    %v907 = vrot.slane %v906, 2
    %v908 = vadd.f32 %v906, %v907
    %v909 = vrot.slane %v908, 1
    %v910 = vadd.f32 %v908, %v909
    %v911 = vmul.f32 %v910, %v648
    %v912 = vadd.f32 %v911, 1e-05
    %v913 = vrsqrt.pop %v912
    %v914 = vmul.f32 %v913, %v912
    %v915 = vmul.f32 %v914, %v913
    %v916 = vmul.f32 0.5, %v915
    %v917 = vsub.f32 1.5, %v916
    %v918 = vmul.f32 %v913, %v917
    %vm919 = vweird.f32 %v912
    %vm920 = vweird.f32 %v913
    %vm921 = vmor %vm919, %vm920
    %v922 = vsel %vm921, %v913, %v918
    %v923 = vmul.f32 %v650, %v922
    %v924 = vmul.f32 %v651, %v922
    %v925 = vmul.f32 %v652, %v922
    %v926 = vmul.f32 %v653, %v922
    %v927 = vmul.f32 %v654, %v922
    %v928 = vmul.f32 %v655, %v922
    %v929 = vmul.f32 %v656, %v922
    %v930 = vmul.f32 %v657, %v922
    %v931 = vmul.f32 %v658, %v922
    %v932 = vmul.f32 %v659, %v922
    %v933 = vmul.f32 %v660, %v922
    %v934 = vmul.f32 %v661, %v922
    %v935 = vmul.f32 %v662, %v922
    %v936 = vmul.f32 %v663, %v922
    %v937 = vmul.f32 %v664, %v922
    %v938 = vmul.f32 %v665, %v922
    %v939 = vmul.f32 %v666, %v922
    %v940 = vmul.f32 %v667, %v922
    %v941 = vmul.f32 %v668, %v922
    %v942 = vmul.f32 %v669, %v922
    %v943 = vmul.f32 %v670, %v922
    %v944 = vmul.f32 %v671, %v922
    %v945 = vmul.f32 %v672, %v922
    %v946 = vmul.f32 %v673, %v922
    %v947 = vmul.f32 %v674, %v922
    %v948 = vmul.f32 %v675, %v922
    %v949 = vmul.f32 %v676, %v922
    %v950 = vmul.f32 %v677, %v922
    %v951 = vmul.f32 %v678, %v922
    %v952 = vmul.f32 %v679, %v922
    %v953 = vmul.f32 %v680, %v922
    %v954 = vmul.f32 %v681, %v922
    %v955 = vmul.f32 %v682, %v922
    %v956 = vmul.f32 %v683, %v922
    %v957 = vmul.f32 %v684, %v922
    %v958 = vmul.f32 %v685, %v922
    %v959 = vmul.f32 %v686, %v922
    %v960 = vmul.f32 %v687, %v922
    %v961 = vmul.f32 %v688, %v922
    %v962 = vmul.f32 %v689, %v922
    %v963 = vmul.f32 %v690, %v922
    %v964 = vmul.f32 %v691, %v922
    %v965 = vmul.f32 %v692, %v922
    %v966 = vmul.f32 %v693, %v922
    %v967 = vmul.f32 %v694, %v922
    %v968 = vmul.f32 %v695, %v922
    %v969 = vmul.f32 %v696, %v922
    %v970 = vmul.f32 %v697, %v922
    %v971 = vmul.f32 %v698, %v922
    %v972 = vmul.f32 %v699, %v922
    %v973 = vmul.f32 %v700, %v922
    %v974 = vmul.f32 %v701, %v922
    %v975 = vmul.f32 %v702, %v922
    %v976 = vmul.f32 %v703, %v922
    %v977 = vmul.f32 %v704, %v922
    %v978 = vmul.f32 %v705, %v922
    %v979 = vmul.f32 %v706, %v922
    %v980 = vmul.f32 %v707, %v922
    %v981 = vmul.f32 %v708, %v922
    %v982 = vmul.f32 %v709, %v922
    %v983 = vmul.f32 %v710, %v922
    %v984 = vmul.f32 %v711, %v922
    %v985 = vmul.f32 %v712, %v922
    %v986 = vmul.f32 %v713, %v922
    %v987 = vperm.slane %v26, 0
    %v988 = vmul.f32 %v923, %v987
    %v989 = vmul.f32 %v924, %v987
    %v990 = vmul.f32 %v925, %v987
    %v991 = vmul.f32 %v926, %v987
    %v992 = vmul.f32 %v927, %v987
    %v993 = vmul.f32 %v928, %v987
    %v994 = vmul.f32 %v929, %v987
    %v995 = vmul.f32 %v930, %v987
    %v996 = vmul.f32 %v931, %v987
    %v997 = vmul.f32 %v932, %v987
    %v998 = vmul.f32 %v933, %v987
    %v999 = vmul.f32 %v934, %v987
    %v1000 = vmul.f32 %v935, %v987
    %v1001 = vmul.f32 %v936, %v987
    %v1002 = vmul.f32 %v937, %v987
    %v1003 = vmul.f32 %v938, %v987
    %v1004 = vmul.f32 %v939, %v987
    %v1005 = vmul.f32 %v940, %v987
    %v1006 = vmul.f32 %v941, %v987
    %v1007 = vmul.f32 %v942, %v987
    %v1008 = vmul.f32 %v943, %v987
    %v1009 = vmul.f32 %v944, %v987
    %v1010 = vmul.f32 %v945, %v987
    %v1011 = vmul.f32 %v946, %v987
    %v1012 = vmul.f32 %v947, %v987
    %v1013 = vmul.f32 %v948, %v987
    %v1014 = vmul.f32 %v949, %v987
    %v1015 = vmul.f32 %v950, %v987
    %v1016 = vmul.f32 %v951, %v987
    %v1017 = vmul.f32 %v952, %v987
    %v1018 = vmul.f32 %v953, %v987
    %v1019 = vmul.f32 %v954, %v987
    %v1020 = vmul.f32 %v955, %v987
    %v1021 = vmul.f32 %v956, %v987
    %v1022 = vmul.f32 %v957, %v987
    %v1023 = vmul.f32 %v958, %v987
    %v1024 = vmul.f32 %v959, %v987
    %v1025 = vmul.f32 %v960, %v987
    %v1026 = vmul.f32 %v961, %v987
    %v1027 = vmul.f32 %v962, %v987
    %v1028 = vmul.f32 %v963, %v987
    %v1029 = vmul.f32 %v964, %v987
    %v1030 = vmul.f32 %v965, %v987
    %v1031 = vmul.f32 %v966, %v987
    %v1032 = vmul.f32 %v967, %v987
    %v1033 = vmul.f32 %v968, %v987
    %v1034 = vmul.f32 %v969, %v987
    %v1035 = vmul.f32 %v970, %v987
    %v1036 = vmul.f32 %v971, %v987
    %v1037 = vmul.f32 %v972, %v987
    %v1038 = vmul.f32 %v973, %v987
    %v1039 = vmul.f32 %v974, %v987
    %v1040 = vmul.f32 %v975, %v987
    %v1041 = vmul.f32 %v976, %v987
    %v1042 = vmul.f32 %v977, %v987
    %v1043 = vmul.f32 %v978, %v987
    %v1044 = vmul.f32 %v979, %v987
    %v1045 = vmul.f32 %v980, %v987
    %v1046 = vmul.f32 %v981, %v987
    %v1047 = vmul.f32 %v982, %v987
    %v1048 = vmul.f32 %v983, %v987
    %v1049 = vmul.f32 %v984, %v987
    %v1050 = vmul.f32 %v985, %v987
    %v1051 = vmul.f32 %v986, %v987
    %v1052 = vperm.slane %v27, 0
    %v1053 = vadd.f32 %v988, %v1052
    %v1054 = vadd.f32 %v989, %v1052
    %v1055 = vadd.f32 %v990, %v1052
    %v1056 = vadd.f32 %v991, %v1052
    %v1057 = vadd.f32 %v992, %v1052
    %v1058 = vadd.f32 %v993, %v1052
    %v1059 = vadd.f32 %v994, %v1052
    %v1060 = vadd.f32 %v995, %v1052
    %v1061 = vadd.f32 %v996, %v1052
    %v1062 = vadd.f32 %v997, %v1052
    %v1063 = vadd.f32 %v998, %v1052
    %v1064 = vadd.f32 %v999, %v1052
    %v1065 = vadd.f32 %v1000, %v1052
    %v1066 = vadd.f32 %v1001, %v1052
    %v1067 = vadd.f32 %v1002, %v1052
    %v1068 = vadd.f32 %v1003, %v1052
    %v1069 = vadd.f32 %v1004, %v1052
    %v1070 = vadd.f32 %v1005, %v1052
    %v1071 = vadd.f32 %v1006, %v1052
    %v1072 = vadd.f32 %v1007, %v1052
    %v1073 = vadd.f32 %v1008, %v1052
    %v1074 = vadd.f32 %v1009, %v1052
    %v1075 = vadd.f32 %v1010, %v1052
    %v1076 = vadd.f32 %v1011, %v1052
    %v1077 = vadd.f32 %v1012, %v1052
    %v1078 = vadd.f32 %v1013, %v1052
    %v1079 = vadd.f32 %v1014, %v1052
    %v1080 = vadd.f32 %v1015, %v1052
    %v1081 = vadd.f32 %v1016, %v1052
    %v1082 = vadd.f32 %v1017, %v1052
    %v1083 = vadd.f32 %v1018, %v1052
    %v1084 = vadd.f32 %v1019, %v1052
    %v1085 = vadd.f32 %v1020, %v1052
    %v1086 = vadd.f32 %v1021, %v1052
    %v1087 = vadd.f32 %v1022, %v1052
    %v1088 = vadd.f32 %v1023, %v1052
    %v1089 = vadd.f32 %v1024, %v1052
    %v1090 = vadd.f32 %v1025, %v1052
    %v1091 = vadd.f32 %v1026, %v1052
    %v1092 = vadd.f32 %v1027, %v1052
    %v1093 = vadd.f32 %v1028, %v1052
    %v1094 = vadd.f32 %v1029, %v1052
    %v1095 = vadd.f32 %v1030, %v1052
    %v1096 = vadd.f32 %v1031, %v1052
    %v1097 = vadd.f32 %v1032, %v1052
    %v1098 = vadd.f32 %v1033, %v1052
    %v1099 = vadd.f32 %v1034, %v1052
    %v1100 = vadd.f32 %v1035, %v1052
    %v1101 = vadd.f32 %v1036, %v1052
    %v1102 = vadd.f32 %v1037, %v1052
    %v1103 = vadd.f32 %v1038, %v1052
    %v1104 = vadd.f32 %v1039, %v1052
    %v1105 = vadd.f32 %v1040, %v1052
    %v1106 = vadd.f32 %v1041, %v1052
    %v1107 = vadd.f32 %v1042, %v1052
    %v1108 = vadd.f32 %v1043, %v1052
    %v1109 = vadd.f32 %v1044, %v1052
    %v1110 = vadd.f32 %v1045, %v1052
    %v1111 = vadd.f32 %v1046, %v1052
    %v1112 = vadd.f32 %v1047, %v1052
    %v1113 = vadd.f32 %v1048, %v1052
    %v1114 = vadd.f32 %v1049, %v1052
    %v1115 = vadd.f32 %v1050, %v1052
    %v1116 = vadd.f32 %v1051, %v1052
    %v1117 = vmax.f32 %v1053, 0.0
    %v1118 = vmax.f32 %v1054, 0.0
    %v1119 = vmax.f32 %v1055, 0.0
    %v1120 = vmax.f32 %v1056, 0.0
    %v1121 = vmax.f32 %v1057, 0.0
    %v1122 = vmax.f32 %v1058, 0.0
    %v1123 = vmax.f32 %v1059, 0.0
    %v1124 = vmax.f32 %v1060, 0.0
    %v1125 = vmax.f32 %v1061, 0.0
    %v1126 = vmax.f32 %v1062, 0.0
    %v1127 = vmax.f32 %v1063, 0.0
    %v1128 = vmax.f32 %v1064, 0.0
    %v1129 = vmax.f32 %v1065, 0.0
    %v1130 = vmax.f32 %v1066, 0.0
    %v1131 = vmax.f32 %v1067, 0.0
    %v1132 = vmax.f32 %v1068, 0.0
    %v1133 = vmax.f32 %v1069, 0.0
    %v1134 = vmax.f32 %v1070, 0.0
    %v1135 = vmax.f32 %v1071, 0.0
    %v1136 = vmax.f32 %v1072, 0.0
    %v1137 = vmax.f32 %v1073, 0.0
    %v1138 = vmax.f32 %v1074, 0.0
    %v1139 = vmax.f32 %v1075, 0.0
    %v1140 = vmax.f32 %v1076, 0.0
    %v1141 = vmax.f32 %v1077, 0.0
    %v1142 = vmax.f32 %v1078, 0.0
    %v1143 = vmax.f32 %v1079, 0.0
    %v1144 = vmax.f32 %v1080, 0.0
    %v1145 = vmax.f32 %v1081, 0.0
    %v1146 = vmax.f32 %v1082, 0.0
    %v1147 = vmax.f32 %v1083, 0.0
    %v1148 = vmax.f32 %v1084, 0.0
    %v1149 = vmax.f32 %v1085, 0.0
    %v1150 = vmax.f32 %v1086, 0.0
    %v1151 = vmax.f32 %v1087, 0.0
    %v1152 = vmax.f32 %v1088, 0.0
    %v1153 = vmax.f32 %v1089, 0.0
    %v1154 = vmax.f32 %v1090, 0.0
    %v1155 = vmax.f32 %v1091, 0.0
    %v1156 = vmax.f32 %v1092, 0.0
    %v1157 = vmax.f32 %v1093, 0.0
    %v1158 = vmax.f32 %v1094, 0.0
    %v1159 = vmax.f32 %v1095, 0.0
    %v1160 = vmax.f32 %v1096, 0.0
    %v1161 = vmax.f32 %v1097, 0.0
    %v1162 = vmax.f32 %v1098, 0.0
    %v1163 = vmax.f32 %v1099, 0.0
    %v1164 = vmax.f32 %v1100, 0.0
    %v1165 = vmax.f32 %v1101, 0.0
    %v1166 = vmax.f32 %v1102, 0.0
    %v1167 = vmax.f32 %v1103, 0.0
    %v1168 = vmax.f32 %v1104, 0.0
    %v1169 = vmax.f32 %v1105, 0.0
    %v1170 = vmax.f32 %v1106, 0.0
    %v1171 = vmax.f32 %v1107, 0.0
    %v1172 = vmax.f32 %v1108, 0.0
    %v1173 = vmax.f32 %v1109, 0.0
    %v1174 = vmax.f32 %v1110, 0.0
    %v1175 = vmax.f32 %v1111, 0.0
    %v1176 = vmax.f32 %v1112, 0.0
    %v1177 = vmax.f32 %v1113, 0.0
    %v1178 = vmax.f32 %v1114, 0.0
    %v1179 = vmax.f32 %v1115, 0.0
    %v1180 = vmax.f32 %v1116, 0.0
    %v1181 = vsel %vm107, %v1117, 0.0
    %v1182 = vsel %vm107, %v1118, 0.0
    %v1183 = vadd.f32 %v1181, %v1182
    %v1184 = vsel %vm107, %v1119, 0.0
    %v1185 = vadd.f32 %v1183, %v1184
    %v1186 = vsel %vm107, %v1120, 0.0
    %v1187 = vadd.f32 %v1185, %v1186
    %v1188 = vsel %vm107, %v1121, 0.0
    %v1189 = vadd.f32 %v1187, %v1188
    %v1190 = vsel %vm107, %v1122, 0.0
    %v1191 = vadd.f32 %v1189, %v1190
    %v1192 = vsel %vm107, %v1123, 0.0
    %v1193 = vadd.f32 %v1191, %v1192
    %v1194 = vsel %vm107, %v1124, 0.0
    %v1195 = vadd.f32 %v1193, %v1194
    %v1196 = vsel %vm107, %v1125, 0.0
    %v1197 = vadd.f32 %v1195, %v1196
    %v1198 = vsel %vm107, %v1126, 0.0
    %v1199 = vadd.f32 %v1197, %v1198
    %v1200 = vsel %vm107, %v1127, 0.0
    %v1201 = vadd.f32 %v1199, %v1200
    %v1202 = vsel %vm107, %v1128, 0.0
    %v1203 = vadd.f32 %v1201, %v1202
    %v1204 = vsel %vm107, %v1129, 0.0
    %v1205 = vadd.f32 %v1203, %v1204
    %v1206 = vsel %vm107, %v1130, 0.0
    %v1207 = vadd.f32 %v1205, %v1206
    %v1208 = vsel %vm107, %v1131, 0.0
    %v1209 = vadd.f32 %v1207, %v1208
    %v1210 = vsel %vm107, %v1132, 0.0
    %v1211 = vadd.f32 %v1209, %v1210
    %v1212 = vsel %vm107, %v1133, 0.0
    %v1213 = vadd.f32 %v1211, %v1212
    %v1214 = vsel %vm107, %v1134, 0.0
    %v1215 = vadd.f32 %v1213, %v1214
    %v1216 = vsel %vm107, %v1135, 0.0
    %v1217 = vadd.f32 %v1215, %v1216
    %v1218 = vsel %vm107, %v1136, 0.0
    %v1219 = vadd.f32 %v1217, %v1218
    %v1220 = vsel %vm107, %v1137, 0.0
    %v1221 = vadd.f32 %v1219, %v1220
    %v1222 = vsel %vm107, %v1138, 0.0
    %v1223 = vadd.f32 %v1221, %v1222
    %v1224 = vsel %vm107, %v1139, 0.0
    %v1225 = vadd.f32 %v1223, %v1224
    %v1226 = vsel %vm107, %v1140, 0.0
    %v1227 = vadd.f32 %v1225, %v1226
    %v1228 = vsel %vm107, %v1141, 0.0
    %v1229 = vadd.f32 %v1227, %v1228
    %v1230 = vsel %vm107, %v1142, 0.0
    %v1231 = vadd.f32 %v1229, %v1230
    %v1232 = vsel %vm107, %v1143, 0.0
    %v1233 = vadd.f32 %v1231, %v1232
    %v1234 = vsel %vm107, %v1144, 0.0
    %v1235 = vadd.f32 %v1233, %v1234
    %v1236 = vsel %vm107, %v1145, 0.0
    %v1237 = vadd.f32 %v1235, %v1236
    %v1238 = vsel %vm107, %v1146, 0.0
    %v1239 = vadd.f32 %v1237, %v1238
    %v1240 = vsel %vm107, %v1147, 0.0
    %v1241 = vadd.f32 %v1239, %v1240
    %v1242 = vsel %vm107, %v1148, 0.0
    %v1243 = vadd.f32 %v1241, %v1242
    %v1244 = vrot.slane %v1243, 4
    %v1245 = vadd.f32 %v1243, %v1244
    %v1246 = vrot.slane %v1245, 2
    %v1247 = vadd.f32 %v1245, %v1246
    %v1248 = vrot.slane %v1247, 1
    %v1249 = vadd.f32 %v1247, %v1248
    %v1250 = vsel %vm107, %v1149, 0.0
    %v1251 = vsel %vm107, %v1150, 0.0
    %v1252 = vadd.f32 %v1250, %v1251
    %v1253 = vsel %vm107, %v1151, 0.0
    %v1254 = vadd.f32 %v1252, %v1253
    %v1255 = vsel %vm107, %v1152, 0.0
    %v1256 = vadd.f32 %v1254, %v1255
    %v1257 = vsel %vm107, %v1153, 0.0
    %v1258 = vadd.f32 %v1256, %v1257
    %v1259 = vsel %vm107, %v1154, 0.0
    %v1260 = vadd.f32 %v1258, %v1259
    %v1261 = vsel %vm107, %v1155, 0.0
    %v1262 = vadd.f32 %v1260, %v1261
    %v1263 = vsel %vm107, %v1156, 0.0
    %v1264 = vadd.f32 %v1262, %v1263
    %v1265 = vsel %vm107, %v1157, 0.0
    %v1266 = vadd.f32 %v1264, %v1265
    %v1267 = vsel %vm107, %v1158, 0.0
    %v1268 = vadd.f32 %v1266, %v1267
    %v1269 = vsel %vm107, %v1159, 0.0
    %v1270 = vadd.f32 %v1268, %v1269
    %v1271 = vsel %vm107, %v1160, 0.0
    %v1272 = vadd.f32 %v1270, %v1271
    %v1273 = vsel %vm107, %v1161, 0.0
    %v1274 = vadd.f32 %v1272, %v1273
    %v1275 = vsel %vm107, %v1162, 0.0
    %v1276 = vadd.f32 %v1274, %v1275
    %v1277 = vsel %vm107, %v1163, 0.0
    %v1278 = vadd.f32 %v1276, %v1277
    %v1279 = vsel %vm107, %v1164, 0.0
    %v1280 = vadd.f32 %v1278, %v1279
    %v1281 = vsel %vm107, %v1165, 0.0
    %v1282 = vadd.f32 %v1280, %v1281
    %v1283 = vsel %vm107, %v1166, 0.0
    %v1284 = vadd.f32 %v1282, %v1283
    %v1285 = vsel %vm107, %v1167, 0.0
    %v1286 = vadd.f32 %v1284, %v1285
    %v1287 = vsel %vm107, %v1168, 0.0
    %v1288 = vadd.f32 %v1286, %v1287
    %v1289 = vsel %vm107, %v1169, 0.0
    %v1290 = vadd.f32 %v1288, %v1289
    %v1291 = vsel %vm107, %v1170, 0.0
    %v1292 = vadd.f32 %v1290, %v1291
    %v1293 = vsel %vm107, %v1171, 0.0
    %v1294 = vadd.f32 %v1292, %v1293
    %v1295 = vsel %vm107, %v1172, 0.0
    %v1296 = vadd.f32 %v1294, %v1295
    %v1297 = vsel %vm107, %v1173, 0.0
    %v1298 = vadd.f32 %v1296, %v1297
    %v1299 = vsel %vm107, %v1174, 0.0
    %v1300 = vadd.f32 %v1298, %v1299
    %v1301 = vsel %vm107, %v1175, 0.0
    %v1302 = vadd.f32 %v1300, %v1301
    %v1303 = vsel %vm107, %v1176, 0.0
    %v1304 = vadd.f32 %v1302, %v1303
    %v1305 = vsel %vm107, %v1177, 0.0
    %v1306 = vadd.f32 %v1304, %v1305
    %v1307 = vsel %vm107, %v1178, 0.0
    %v1308 = vadd.f32 %v1306, %v1307
    %v1309 = vsel %vm107, %v1179, 0.0
    %v1310 = vadd.f32 %v1308, %v1309
    %v1311 = vsel %vm107, %v1180, 0.0
    %v1312 = vadd.f32 %v1310, %v1311
    %v1313 = vrot.slane %v1312, 4
    %v1314 = vadd.f32 %v1312, %v1313
    %v1315 = vrot.slane %v1314, 2
    %v1316 = vadd.f32 %v1314, %v1315
    %v1317 = vrot.slane %v1316, 1
    %v1318 = vadd.f32 %v1316, %v1317
    %v1319 = vrcp.pop 256.0
    %v1320 = vmul.f32 256.0, %v1319
    %v1321 = vsub.f32 1.0, %v1320
    %v1322 = vmul.f32 %v1319, %v1321
    %v1323 = vadd.f32 %v1319, %v1322
    %vm1324 = vweird.f32 %v1319
    %v1325 = vsel %vm1324, %v1319, %v1323
    %v1326 = vmul.f32 %v1249, %v1325
    %v1327 = vmul.f32 %v1318, %v1325
    %v1328 = vperm.slane %v28, 0
    %vm1331 = vcmask 1041409
    %v1332 = vsel %vm1331, %v1327, %v1326
    %v1333 = vsel %vm107, %v1332, 0
    %1335 = vmatpush.msra.mxu0 0.0
    %1336 = vmatpush.msra.mxu0 0.0
    %1337 = vmatpush.msra.mxu0 0.0
    %1338 = vmatpush.msra.mxu0 0.0
    %1339 = vmatpush.msra.mxu0 0.0
    %1340 = vmatpush.msra.mxu0 0.0
    %1341 = vmatpush.msra.mxu0 0.0
    %1342 = vmatpush.msra.mxu0 0.0
    %1343 = vmatpush.msra.mxu0 0.0
    %1344 = vmatpush.msra.mxu0 0.0
    %1345 = vmatpush.msra.mxu0 0.0
    %1346 = vmatpush.msra.mxu0 0.0
    %1347 = vmatpush.msra.mxu0 %v25
    %1348 = vmatpush.msra.mxu0 %v24
    %1349 = vmatpush.msra.mxu0 %v23
    %1350 = vmatpush.msra.mxu0 %v22
    %1351 = vmatmul.f32.gmra.mxu0 %v1333
    %v1352 = vpop.f32.mrf.mxu0
    %v1353 = vadd.f32 %v1328, %v1352
    %1354 = vdwg.mxu0
    %v1355 = vld [vmem:[%s2] sm:$0xff]
    %v1356 = vld [vmem:[%s2 + $0x8] sm:$0xff]
    %v1357 = vld [vmem:[%s2 + $0x10] sm:$0xff]
    %v1358 = vld [vmem:[%s2 + $0x18] sm:$0xff]
    %v1359 = vld [vmem:[%s2 + $0x20] sm:$0xff]
    %v1360 = vld [vmem:[%s2 + $0x28] sm:$0xff]
    %v1361 = vld [vmem:[%s2 + $0x30] sm:$0xff]
    %v1362 = vld [vmem:[%s2 + $0x38] sm:$0xff]
    %1363 = vst.msk [vmem:[#allocation2] sm:$0xff] %vm107, %v1355
    %1364 = vst.msk [vmem:[#allocation2 + $0x8] sm:$0xff] %vm107, %v1356
    %1365 = vst.msk [vmem:[#allocation2 + $0x10] sm:$0xff] %vm107, %v1357
    %1366 = vst.msk [vmem:[#allocation2 + $0x18] sm:$0xff] %vm107, %v1358
    %1367 = vst.msk [vmem:[#allocation2 + $0x20] sm:$0xff] %vm107, %v1359
    %1368 = vst.msk [vmem:[#allocation2 + $0x28] sm:$0xff] %vm107, %v1360
    %1369 = vst.msk [vmem:[#allocation2 + $0x30] sm:$0xff] %vm107, %v1361
    %1370 = vst.msk [vmem:[#allocation2 + $0x38] sm:$0xff] %vm107, %v1362
    %vm1371 = vcmask 254976
    %1372 = vst.msk [vmem:[#allocation2] sm:$0x3] %vm1371, %v1353
    %v1373 = vld [vmem:[#allocation2] sm:$0xff]
    %v1374 = vld [vmem:[#allocation2 + $0x8] sm:$0xff]
    %v1375 = vld [vmem:[#allocation2 + $0x10] sm:$0xff]
    %v1376 = vld [vmem:[#allocation2 + $0x18] sm:$0xff]
    %v1377 = vld [vmem:[#allocation2 + $0x20] sm:$0xff]
    %v1378 = vld [vmem:[#allocation2 + $0x28] sm:$0xff]
    %v1379 = vld [vmem:[#allocation2 + $0x30] sm:$0xff]
    %v1380 = vld [vmem:[#allocation2 + $0x38] sm:$0xff]
    %v1381 = vperm.slane %v41, 0
    %v1383 = vsel %vm107, %v1373, 0
    %v1386 = vsel %vm107, %v1374, 0
    %v1389 = vsel %vm107, %v1375, 0
    %v1392 = vsel %vm107, %v1376, 0
    %v1395 = vsel %vm107, %v1377, 0
    %v1398 = vsel %vm107, %v1378, 0
    %v1401 = vsel %vm107, %v1379, 0
    %v1404 = vsel %vm107, %v1380, 0
    %1406 = vmatpush.msra.mxu0 0.0
    %1407 = vmatpush.msra.mxu0 0.0
    %1408 = vmatpush.msra.mxu0 0.0
    %1409 = vmatpush.msra.mxu0 0.0
    %1410 = vmatpush.msra.mxu0 0.0
    %1411 = vmatpush.msra.mxu0 0.0
    %1412 = vmatpush.msra.mxu0 0.0
    %1413 = vmatpush.msra.mxu0 0.0
    %1414 = vmatpush.msra.mxu0 0.0
    %1415 = vmatpush.msra.mxu0 0.0
    %1416 = vmatpush.msra.mxu0 0.0
    %1417 = vmatpush.msra.mxu0 0.0
    %1418 = vmatpush.msra.mxu0 %v32
    %1419 = vmatpush.msra.mxu0 %v31
    %1420 = vmatpush.msra.mxu0 %v30
    %1421 = vmatpush.msra.mxu0 %v29
    %1422 = vmatmul.f32.gmra.mxu0 %v1383
    %v1423 = vpop.f32.mrf.mxu0
    %v1424 = vadd.f32 %v1381, %v1423
    %1425 = vmatmul.f32.gmra.mxu0 %v1386
    %v1426 = vpop.f32.mrf.mxu0
    %v1427 = vadd.f32 %v1381, %v1426
    %1428 = vmatmul.f32.gmra.mxu0 %v1389
    %v1429 = vpop.f32.mrf.mxu0
    %v1430 = vadd.f32 %v1381, %v1429
    %1431 = vmatmul.f32.gmra.mxu0 %v1392
    %v1432 = vpop.f32.mrf.mxu0
    %v1433 = vadd.f32 %v1381, %v1432
    %1434 = vmatmul.f32.gmra.mxu0 %v1395
    %v1435 = vpop.f32.mrf.mxu0
    %v1436 = vadd.f32 %v1381, %v1435
    %1437 = vmatmul.f32.gmra.mxu0 %v1398
    %v1438 = vpop.f32.mrf.mxu0
    %v1439 = vadd.f32 %v1381, %v1438
    %1440 = vmatmul.f32.gmra.mxu0 %v1401
    %v1441 = vpop.f32.mrf.mxu0
    %v1442 = vadd.f32 %v1381, %v1441
    %1443 = vmatmul.f32.gmra.mxu0 %v1404
    %v1444 = vpop.f32.mrf.mxu0
    %v1445 = vadd.f32 %v1381, %v1444
    %1446 = vdwg.mxu0
    %v1447 = vlaneseq
    %v1448 = vand.u32 %v1447, 127
    %vm1449 = vcmp.ge.s32.totalorder %v1448, 64
    %vm1450 = vcmp.lt.s32.totalorder %v1448, 96
    %vm1451 = vmand %vm1449, %vm1450
    %v1452 = vtanh.pop %v1424
    %v1453 = vxor.u32 %v1424, 2147483648
    %v1454 = vmul.f32 %v1453, 1.442695
    %v1455 = vpow.pop %v1454
    %v1456 = vadd.f32 %v1455, 1.0
    %v1457 = vrcp.pop %v1456
    %v1458 = vmul.f32 %v1456, %v1457
    %v1459 = vsub.f32 1.0, %v1458
    %v1460 = vmul.f32 %v1457, %v1459
    %v1461 = vadd.f32 %v1457, %v1460
    %vm1462 = vweird.f32 %v1456
    %vm1463 = vweird.f32 %v1457
    %vm1464 = vmor %vm1462, %vm1463
    %v1465 = vsel %vm1464, %v1457, %v1461
    %v1466 = vand.u32 2147483647, %v1456
    %vm1467 = vcmp.eq.f32.partialorder %v1466, 8.507059e+37
    %v1468 = vand.u32 %v1456, 2147483648
    %v1469 = vor.u32 1.1754944e-38, %v1468
    %v1470 = vsel %vm1467, %v1469, %v1465
    %v1471 = vmul.f32 1.0, %v1470
    %v1472 = vsel %vm1451, %v1452, %v1471
    %v1473 = vmul.f32 %v1472, 0.0
    %1475 = vrot.lane.b32.xlu0 %v1472, 64
    %v1476 = vpop.permute.xlu0 %1475
    %v1478 = vmul.f32 %v1472, %v1476
    %1480 = vrot.lane.b32.xlu0 %v1478, 32
    %v1481 = vpop.permute.xlu0 %1480
    %v1483 = vadd.f32 %v1473, %v1481
    %v1484 = vtanh.pop %v1483
    %1486 = vrot.lane.b32.xlu0 %v1484, 64
    %v1487 = vpop.permute.xlu0 %1486
    %v1489 = vmul.f32 %v1472, %v1487
    %1490 = vst.msk [vmem:[#allocation3] sm:$0xff] %vm107, 0.0
    %1491 = vst.msk [vmem:[#allocation3 + $0x8] sm:$0xff] %vm107, 0.0
    %1492 = vst.msk [vmem:[#allocation3 + $0x10] sm:$0xff] %vm107, 0.0
    %1493 = vst.msk [vmem:[#allocation3 + $0x18] sm:$0xff] %vm107, 0.0
    %1494 = vst.msk [vmem:[#allocation3 + $0x20] sm:$0xff] %vm107, 0.0
    %1495 = vst.msk [vmem:[#allocation3 + $0x28] sm:$0xff] %vm107, 0.0
    %1496 = vst.msk [vmem:[#allocation3 + $0x30] sm:$0xff] %vm107, 0.0
    %1498 = vrot.lane.b32.xlu0 %v1489, 32
    %v1499 = vpop.permute.xlu0 %1498
    %v1500 = vsel %vm107, %v1499, 0
    %1502 = vmatpush.msra.mxu0 0.0
    %1503 = vmatpush.msra.mxu0 0.0
    %1504 = vmatpush.msra.mxu0 0.0
    %1505 = vmatpush.msra.mxu0 0.0
    %1506 = vmatpush.msra.mxu0 0.0
    %1507 = vmatpush.msra.mxu0 0.0
    %1508 = vmatpush.msra.mxu0 0.0
    %1509 = vmatpush.msra.mxu0 0.0
    %1510 = vmatpush.msra.mxu0 0.0
    %1511 = vmatpush.msra.mxu0 0.0
    %1512 = vmatpush.msra.mxu0 0.0
    %1513 = vmatpush.msra.mxu0 0.0
    %1514 = vmatpush.msra.mxu0 %v36
    %1515 = vmatpush.msra.mxu0 %v35
    %1516 = vmatpush.msra.mxu0 %v34
    %1517 = vmatpush.msra.mxu0 %v33
    %1518 = vmatmul.f32.gmra.mxu0 %v1500
    %v1519 = vpop.f32.mrf.mxu0
    %v1520 = vadd.f32 0.0, %v1519
    %1521 = vdwg.mxu0
    %v1522 = vadd.f32 %v1427, %v1520
    %v1523 = vtanh.pop %v1522
    %v1524 = vxor.u32 %v1522, 2147483648
    %v1525 = vmul.f32 %v1524, 1.442695
    %v1526 = vpow.pop %v1525
    %v1527 = vadd.f32 %v1526, 1.0
    %v1528 = vrcp.pop %v1527
    %v1529 = vmul.f32 %v1527, %v1528
    %v1530 = vsub.f32 1.0, %v1529
    %v1531 = vmul.f32 %v1528, %v1530
    %v1532 = vadd.f32 %v1528, %v1531
    %vm1533 = vweird.f32 %v1527
    %vm1534 = vweird.f32 %v1528
    %vm1535 = vmor %vm1533, %vm1534
    %v1536 = vsel %vm1535, %v1528, %v1532
    %v1537 = vand.u32 2147483647, %v1527
    %vm1538 = vcmp.eq.f32.partialorder %v1537, 8.507059e+37
    %v1539 = vand.u32 %v1527, 2147483648
    %v1540 = vor.u32 1.1754944e-38, %v1539
    %v1541 = vsel %vm1538, %v1540, %v1536
    %v1542 = vmul.f32 1.0, %v1541
    %v1543 = vsel %vm1451, %v1523, %v1542
    %v1544 = vmul.f32 %v1543, %v1483
    %1546 = vrot.lane.b32.xlu0 %v1543, 64
    %v1547 = vpop.permute.xlu0 %1546
    %v1549 = vmul.f32 %v1543, %v1547
    %1551 = vrot.lane.b32.xlu0 %v1549, 32
    %v1552 = vpop.permute.xlu0 %1551
    %v1554 = vadd.f32 %v1544, %v1552
    %v1555 = vtanh.pop %v1554
    %1557 = vrot.lane.b32.xlu0 %v1555, 64
    %v1558 = vpop.permute.xlu0 %1557
    %v1560 = vmul.f32 %v1543, %v1558
    %1562 = vrot.lane.b32.xlu0 %v1560, 32
    %v1563 = vpop.permute.xlu0 %1562
    %1565 = vst.msk [vmem:[#allocation3] sm:$0x3] %vm1371, %v1563
    %v1566 = vsel %vm107, %v1563, 0
    %1568 = vmatpush.msra.mxu0 0.0
    %1569 = vmatpush.msra.mxu0 0.0
    %1570 = vmatpush.msra.mxu0 0.0
    %1571 = vmatpush.msra.mxu0 0.0
    %1572 = vmatpush.msra.mxu0 0.0
    %1573 = vmatpush.msra.mxu0 0.0
    %1574 = vmatpush.msra.mxu0 0.0
    %1575 = vmatpush.msra.mxu0 0.0
    %1576 = vmatpush.msra.mxu0 0.0
    %1577 = vmatpush.msra.mxu0 0.0
    %1578 = vmatpush.msra.mxu0 0.0
    %1579 = vmatpush.msra.mxu0 0.0
    %1580 = vmatpush.msra.mxu0 %v36
    %1581 = vmatpush.msra.mxu0 %v35
    %1582 = vmatpush.msra.mxu0 %v34
    %1583 = vmatpush.msra.mxu0 %v33
    %1584 = vmatmul.f32.gmra.mxu0 %v1566
    %v1585 = vpop.f32.mrf.mxu0
    %v1586 = vadd.f32 0.0, %v1585
    %1587 = vdwg.mxu0
    %v1588 = vadd.f32 %v1430, %v1586
    %v1589 = vtanh.pop %v1588
    %v1590 = vxor.u32 %v1588, 2147483648
    %v1591 = vmul.f32 %v1590, 1.442695
    %v1592 = vpow.pop %v1591
    %v1593 = vadd.f32 %v1592, 1.0
    %v1594 = vrcp.pop %v1593
    %v1595 = vmul.f32 %v1593, %v1594
    %v1596 = vsub.f32 1.0, %v1595
    %v1597 = vmul.f32 %v1594, %v1596
    %v1598 = vadd.f32 %v1594, %v1597
    %vm1599 = vweird.f32 %v1593
    %vm1600 = vweird.f32 %v1594
    %vm1601 = vmor %vm1599, %vm1600
    %v1602 = vsel %vm1601, %v1594, %v1598
    %v1603 = vand.u32 2147483647, %v1593
    %vm1604 = vcmp.eq.f32.partialorder %v1603, 8.507059e+37
    %v1605 = vand.u32 %v1593, 2147483648
    %v1606 = vor.u32 1.1754944e-38, %v1605
    %v1607 = vsel %vm1604, %v1606, %v1602
    %v1608 = vmul.f32 1.0, %v1607
    %v1609 = vsel %vm1451, %v1589, %v1608
    %v1610 = vmul.f32 %v1609, %v1554
    %1612 = vrot.lane.b32.xlu0 %v1609, 64
    %v1613 = vpop.permute.xlu0 %1612
    %v1615 = vmul.f32 %v1609, %v1613
    %1617 = vrot.lane.b32.xlu0 %v1615, 32
    %v1618 = vpop.permute.xlu0 %1617
    %v1620 = vadd.f32 %v1610, %v1618
    %v1621 = vtanh.pop %v1620
    %1623 = vrot.lane.b32.xlu0 %v1621, 64
    %v1624 = vpop.permute.xlu0 %1623
    %v1626 = vmul.f32 %v1609, %v1624
    %1628 = vrot.lane.b32.xlu0 %v1626, 32
    %v1629 = vpop.permute.xlu0 %1628
    %1631 = vst.msk [vmem:[#allocation3 + $0x8] sm:$0x3] %vm1371, %v1629
    %v1632 = vsel %vm107, %v1629, 0
    %1634 = vmatpush.msra.mxu0 0.0
    %1635 = vmatpush.msra.mxu0 0.0
    %1636 = vmatpush.msra.mxu0 0.0
    %1637 = vmatpush.msra.mxu0 0.0
    %1638 = vmatpush.msra.mxu0 0.0
    %1639 = vmatpush.msra.mxu0 0.0
    %1640 = vmatpush.msra.mxu0 0.0
    %1641 = vmatpush.msra.mxu0 0.0
    %1642 = vmatpush.msra.mxu0 0.0
    %1643 = vmatpush.msra.mxu0 0.0
    %1644 = vmatpush.msra.mxu0 0.0
    %1645 = vmatpush.msra.mxu0 0.0
    %1646 = vmatpush.msra.mxu0 %v36
    %1647 = vmatpush.msra.mxu0 %v35
    %1648 = vmatpush.msra.mxu0 %v34
    %1649 = vmatpush.msra.mxu0 %v33
    %1650 = vmatmul.f32.gmra.mxu0 %v1632
    %v1651 = vpop.f32.mrf.mxu0
    %v1652 = vadd.f32 0.0, %v1651
    %1653 = vdwg.mxu0
    %v1654 = vadd.f32 %v1433, %v1652
    %v1655 = vtanh.pop %v1654
    %v1656 = vxor.u32 %v1654, 2147483648
    %v1657 = vmul.f32 %v1656, 1.442695
    %v1658 = vpow.pop %v1657
    %v1659 = vadd.f32 %v1658, 1.0
    %v1660 = vrcp.pop %v1659
    %v1661 = vmul.f32 %v1659, %v1660
    %v1662 = vsub.f32 1.0, %v1661
    %v1663 = vmul.f32 %v1660, %v1662
    %v1664 = vadd.f32 %v1660, %v1663
    %vm1665 = vweird.f32 %v1659
    %vm1666 = vweird.f32 %v1660
    %vm1667 = vmor %vm1665, %vm1666
    %v1668 = vsel %vm1667, %v1660, %v1664
    %v1669 = vand.u32 2147483647, %v1659
    %vm1670 = vcmp.eq.f32.partialorder %v1669, 8.507059e+37
    %v1671 = vand.u32 %v1659, 2147483648
    %v1672 = vor.u32 1.1754944e-38, %v1671
    %v1673 = vsel %vm1670, %v1672, %v1668
    %v1674 = vmul.f32 1.0, %v1673
    %v1675 = vsel %vm1451, %v1655, %v1674
    %v1676 = vmul.f32 %v1675, %v1620
    %1678 = vrot.lane.b32.xlu0 %v1675, 64
    %v1679 = vpop.permute.xlu0 %1678
    %v1681 = vmul.f32 %v1675, %v1679
    %1683 = vrot.lane.b32.xlu0 %v1681, 32
    %v1684 = vpop.permute.xlu0 %1683
    %v1686 = vadd.f32 %v1676, %v1684
    %v1687 = vtanh.pop %v1686
    %1689 = vrot.lane.b32.xlu0 %v1687, 64
    %v1690 = vpop.permute.xlu0 %1689
    %v1692 = vmul.f32 %v1675, %v1690
    %1694 = vrot.lane.b32.xlu0 %v1692, 32
    %v1695 = vpop.permute.xlu0 %1694
    %1697 = vst.msk [vmem:[#allocation3 + $0x10] sm:$0x3] %vm1371, %v1695
    %v1698 = vsel %vm107, %v1695, 0
    %1700 = vmatpush.msra.mxu0 0.0
    %1701 = vmatpush.msra.mxu0 0.0
    %1702 = vmatpush.msra.mxu0 0.0
    %1703 = vmatpush.msra.mxu0 0.0
    %1704 = vmatpush.msra.mxu0 0.0
    %1705 = vmatpush.msra.mxu0 0.0
    %1706 = vmatpush.msra.mxu0 0.0
    %1707 = vmatpush.msra.mxu0 0.0
    %1708 = vmatpush.msra.mxu0 0.0
    %1709 = vmatpush.msra.mxu0 0.0
    %1710 = vmatpush.msra.mxu0 0.0
    %1711 = vmatpush.msra.mxu0 0.0
    %1712 = vmatpush.msra.mxu0 %v36
    %1713 = vmatpush.msra.mxu0 %v35
    %1714 = vmatpush.msra.mxu0 %v34
    %1715 = vmatpush.msra.mxu0 %v33
    %1716 = vmatmul.f32.gmra.mxu0 %v1698
    %v1717 = vpop.f32.mrf.mxu0
    %v1718 = vadd.f32 0.0, %v1717
    %1719 = vdwg.mxu0
    %v1720 = vadd.f32 %v1436, %v1718
    %v1721 = vtanh.pop %v1720
    %v1722 = vxor.u32 %v1720, 2147483648
    %v1723 = vmul.f32 %v1722, 1.442695
    %v1724 = vpow.pop %v1723
    %v1725 = vadd.f32 %v1724, 1.0
    %v1726 = vrcp.pop %v1725
    %v1727 = vmul.f32 %v1725, %v1726
    %v1728 = vsub.f32 1.0, %v1727
    %v1729 = vmul.f32 %v1726, %v1728
    %v1730 = vadd.f32 %v1726, %v1729
    %vm1731 = vweird.f32 %v1725
    %vm1732 = vweird.f32 %v1726
    %vm1733 = vmor %vm1731, %vm1732
    %v1734 = vsel %vm1733, %v1726, %v1730
    %v1735 = vand.u32 2147483647, %v1725
    %vm1736 = vcmp.eq.f32.partialorder %v1735, 8.507059e+37
    %v1737 = vand.u32 %v1725, 2147483648
    %v1738 = vor.u32 1.1754944e-38, %v1737
    %v1739 = vsel %vm1736, %v1738, %v1734
    %v1740 = vmul.f32 1.0, %v1739
    %v1741 = vsel %vm1451, %v1721, %v1740
    %v1742 = vmul.f32 %v1741, %v1686
    %1744 = vrot.lane.b32.xlu0 %v1741, 64
    %v1745 = vpop.permute.xlu0 %1744
    %v1747 = vmul.f32 %v1741, %v1745
    %1749 = vrot.lane.b32.xlu0 %v1747, 32
    %v1750 = vpop.permute.xlu0 %1749
    %v1752 = vadd.f32 %v1742, %v1750
    %v1753 = vtanh.pop %v1752
    %1755 = vrot.lane.b32.xlu0 %v1753, 64
    %v1756 = vpop.permute.xlu0 %1755
    %v1758 = vmul.f32 %v1741, %v1756
    %1760 = vrot.lane.b32.xlu0 %v1758, 32
    %v1761 = vpop.permute.xlu0 %1760
    %1763 = vst.msk [vmem:[#allocation3 + $0x18] sm:$0x3] %vm1371, %v1761
    %v1764 = vsel %vm107, %v1761, 0
    %1766 = vmatpush.msra.mxu0 0.0
    %1767 = vmatpush.msra.mxu0 0.0
    %1768 = vmatpush.msra.mxu0 0.0
    %1769 = vmatpush.msra.mxu0 0.0
    %1770 = vmatpush.msra.mxu0 0.0
    %1771 = vmatpush.msra.mxu0 0.0
    %1772 = vmatpush.msra.mxu0 0.0
    %1773 = vmatpush.msra.mxu0 0.0
    %1774 = vmatpush.msra.mxu0 0.0
    %1775 = vmatpush.msra.mxu0 0.0
    %1776 = vmatpush.msra.mxu0 0.0
    %1777 = vmatpush.msra.mxu0 0.0
    %1778 = vmatpush.msra.mxu0 %v36
    %1779 = vmatpush.msra.mxu0 %v35
    %1780 = vmatpush.msra.mxu0 %v34
    %1781 = vmatpush.msra.mxu0 %v33
    %1782 = vmatmul.f32.gmra.mxu0 %v1764
    %v1783 = vpop.f32.mrf.mxu0
    %v1784 = vadd.f32 0.0, %v1783
    %1785 = vdwg.mxu0
    %v1786 = vadd.f32 %v1439, %v1784
    %v1787 = vtanh.pop %v1786
    %v1788 = vxor.u32 %v1786, 2147483648
    %v1789 = vmul.f32 %v1788, 1.442695
    %v1790 = vpow.pop %v1789
    %v1791 = vadd.f32 %v1790, 1.0
    %v1792 = vrcp.pop %v1791
    %v1793 = vmul.f32 %v1791, %v1792
    %v1794 = vsub.f32 1.0, %v1793
    %v1795 = vmul.f32 %v1792, %v1794
    %v1796 = vadd.f32 %v1792, %v1795
    %vm1797 = vweird.f32 %v1791
    %vm1798 = vweird.f32 %v1792
    %vm1799 = vmor %vm1797, %vm1798
    %v1800 = vsel %vm1799, %v1792, %v1796
    %v1801 = vand.u32 2147483647, %v1791
    %vm1802 = vcmp.eq.f32.partialorder %v1801, 8.507059e+37
    %v1803 = vand.u32 %v1791, 2147483648
    %v1804 = vor.u32 1.1754944e-38, %v1803
    %v1805 = vsel %vm1802, %v1804, %v1800
    %v1806 = vmul.f32 1.0, %v1805
    %v1807 = vsel %vm1451, %v1787, %v1806
    %v1808 = vmul.f32 %v1807, %v1752
    %1810 = vrot.lane.b32.xlu0 %v1807, 64
    %v1811 = vpop.permute.xlu0 %1810
    %v1813 = vmul.f32 %v1807, %v1811
    %1815 = vrot.lane.b32.xlu0 %v1813, 32
    %v1816 = vpop.permute.xlu0 %1815
    %v1818 = vadd.f32 %v1808, %v1816
    %v1819 = vtanh.pop %v1818
    %1821 = vrot.lane.b32.xlu0 %v1819, 64
    %v1822 = vpop.permute.xlu0 %1821
    %v1824 = vmul.f32 %v1807, %v1822
    %1826 = vrot.lane.b32.xlu0 %v1824, 32
    %v1827 = vpop.permute.xlu0 %1826
    %1829 = vst.msk [vmem:[#allocation3 + $0x20] sm:$0x3] %vm1371, %v1827
    %v1830 = vsel %vm107, %v1827, 0
    %1832 = vmatpush.msra.mxu0 0.0
    %1833 = vmatpush.msra.mxu0 0.0
    %1834 = vmatpush.msra.mxu0 0.0
    %1835 = vmatpush.msra.mxu0 0.0
    %1836 = vmatpush.msra.mxu0 0.0
    %1837 = vmatpush.msra.mxu0 0.0
    %1838 = vmatpush.msra.mxu0 0.0
    %1839 = vmatpush.msra.mxu0 0.0
    %1840 = vmatpush.msra.mxu0 0.0
    %1841 = vmatpush.msra.mxu0 0.0
    %1842 = vmatpush.msra.mxu0 0.0
    %1843 = vmatpush.msra.mxu0 0.0
    %1844 = vmatpush.msra.mxu0 %v36
    %1845 = vmatpush.msra.mxu0 %v35
    %1846 = vmatpush.msra.mxu0 %v34
    %1847 = vmatpush.msra.mxu0 %v33
    %1848 = vmatmul.f32.gmra.mxu0 %v1830
    %v1849 = vpop.f32.mrf.mxu0
    %v1850 = vadd.f32 0.0, %v1849
    %1851 = vdwg.mxu0
    %v1852 = vadd.f32 %v1442, %v1850
    %v1853 = vtanh.pop %v1852
    %v1854 = vxor.u32 %v1852, 2147483648
    %v1855 = vmul.f32 %v1854, 1.442695
    %v1856 = vpow.pop %v1855
    %v1857 = vadd.f32 %v1856, 1.0
    %v1858 = vrcp.pop %v1857
    %v1859 = vmul.f32 %v1857, %v1858
    %v1860 = vsub.f32 1.0, %v1859
    %v1861 = vmul.f32 %v1858, %v1860
    %v1862 = vadd.f32 %v1858, %v1861
    %vm1863 = vweird.f32 %v1857
    %vm1864 = vweird.f32 %v1858
    %vm1865 = vmor %vm1863, %vm1864
    %v1866 = vsel %vm1865, %v1858, %v1862
    %v1867 = vand.u32 2147483647, %v1857
    %vm1868 = vcmp.eq.f32.partialorder %v1867, 8.507059e+37
    %v1869 = vand.u32 %v1857, 2147483648
    %v1870 = vor.u32 1.1754944e-38, %v1869
    %v1871 = vsel %vm1868, %v1870, %v1866
    %v1872 = vmul.f32 1.0, %v1871
    %v1873 = vsel %vm1451, %v1853, %v1872
    %v1874 = vmul.f32 %v1873, %v1818
    %1876 = vrot.lane.b32.xlu0 %v1873, 64
    %v1877 = vpop.permute.xlu0 %1876
    %v1879 = vmul.f32 %v1873, %v1877
    %1881 = vrot.lane.b32.xlu0 %v1879, 32
    %v1882 = vpop.permute.xlu0 %1881
    %v1884 = vadd.f32 %v1874, %v1882
    %v1885 = vtanh.pop %v1884
    %1887 = vrot.lane.b32.xlu0 %v1885, 64
    %v1888 = vpop.permute.xlu0 %1887
    %v1890 = vmul.f32 %v1873, %v1888
    %1892 = vrot.lane.b32.xlu0 %v1890, 32
    %v1893 = vpop.permute.xlu0 %1892
    %1895 = vst.msk [vmem:[#allocation3 + $0x28] sm:$0x3] %vm1371, %v1893
    %v1896 = vsel %vm107, %v1893, 0
    %1898 = vmatpush.msra.mxu0 0.0
    %1899 = vmatpush.msra.mxu0 0.0
    %1900 = vmatpush.msra.mxu0 0.0
    %1901 = vmatpush.msra.mxu0 0.0
    %1902 = vmatpush.msra.mxu0 0.0
    %1903 = vmatpush.msra.mxu0 0.0
    %1904 = vmatpush.msra.mxu0 0.0
    %1905 = vmatpush.msra.mxu0 0.0
    %1906 = vmatpush.msra.mxu0 0.0
    %1907 = vmatpush.msra.mxu0 0.0
    %1908 = vmatpush.msra.mxu0 0.0
    %1909 = vmatpush.msra.mxu0 0.0
    %1910 = vmatpush.msra.mxu0 %v36
    %1911 = vmatpush.msra.mxu0 %v35
    %1912 = vmatpush.msra.mxu0 %v34
    %1913 = vmatpush.msra.mxu0 %v33
    %1914 = vmatmul.f32.gmra.mxu0 %v1896
    %v1915 = vpop.f32.mrf.mxu0
    %v1916 = vadd.f32 0.0, %v1915
    %1917 = vdwg.mxu0
    %v1918 = vadd.f32 %v1445, %v1916
    %v1919 = vtanh.pop %v1918
    %v1920 = vxor.u32 %v1918, 2147483648
    %v1921 = vmul.f32 %v1920, 1.442695
    %v1922 = vpow.pop %v1921
    %v1923 = vadd.f32 %v1922, 1.0
    %v1924 = vrcp.pop %v1923
    %v1925 = vmul.f32 %v1923, %v1924
    %v1926 = vsub.f32 1.0, %v1925
    %v1927 = vmul.f32 %v1924, %v1926
    %v1928 = vadd.f32 %v1924, %v1927
    %vm1929 = vweird.f32 %v1923
    %vm1930 = vweird.f32 %v1924
    %vm1931 = vmor %vm1929, %vm1930
    %v1932 = vsel %vm1931, %v1924, %v1928
    %v1933 = vand.u32 2147483647, %v1923
    %vm1934 = vcmp.eq.f32.partialorder %v1933, 8.507059e+37
    %v1935 = vand.u32 %v1923, 2147483648
    %v1936 = vor.u32 1.1754944e-38, %v1935
    %v1937 = vsel %vm1934, %v1936, %v1932
    %v1938 = vmul.f32 1.0, %v1937
    %v1939 = vsel %vm1451, %v1919, %v1938
    %v1940 = vmul.f32 %v1939, %v1884
    %1942 = vrot.lane.b32.xlu0 %v1939, 64
    %v1943 = vpop.permute.xlu0 %1942
    %v1945 = vmul.f32 %v1939, %v1943
    %1947 = vrot.lane.b32.xlu0 %v1945, 32
    %v1948 = vpop.permute.xlu0 %1947
    %v1950 = vadd.f32 %v1940, %v1948
    %v1951 = vtanh.pop %v1950
    %1953 = vrot.lane.b32.xlu0 %v1951, 64
    %v1954 = vpop.permute.xlu0 %1953
    %v1956 = vmul.f32 %v1939, %v1954
    %1958 = vrot.lane.b32.xlu0 %v1956, 32
    %v1959 = vpop.permute.xlu0 %1958
    %1961 = vst.msk [vmem:[#allocation3 + $0x30] sm:$0x3] %vm1371, %v1959
    %v1962 = vld [vmem:[#allocation3] sm:$0xff]
    %v1963 = vld [vmem:[#allocation3 + $0x8] sm:$0xff]
    %v1964 = vld [vmem:[#allocation3 + $0x10] sm:$0xff]
    %v1965 = vld [vmem:[#allocation3 + $0x18] sm:$0xff]
    %v1966 = vld [vmem:[#allocation3 + $0x20] sm:$0xff]
    %v1967 = vld [vmem:[#allocation3 + $0x28] sm:$0xff]
    %v1968 = vld [vmem:[#allocation3 + $0x30] sm:$0xff]
    %v1969 = vperm.slane %v42, 0
    %v1971 = vsel %vm107, %v1962, 0
    %v1974 = vsel %vm107, %v1963, 0
    %v1977 = vsel %vm107, %v1964, 0
    %v1980 = vsel %vm107, %v1965, 0
    %v1983 = vsel %vm107, %v1966, 0
    %v1986 = vsel %vm107, %v1967, 0
    %v1989 = vsel %vm107, %v1968, 0
    %1991 = vmatpush.msra.mxu0 0.0
    %1992 = vmatpush.msra.mxu0 0.0
    %1993 = vmatpush.msra.mxu0 0.0
    %1994 = vmatpush.msra.mxu0 0.0
    %1995 = vmatpush.msra.mxu0 0.0
    %1996 = vmatpush.msra.mxu0 0.0
    %1997 = vmatpush.msra.mxu0 0.0
    %1998 = vmatpush.msra.mxu0 0.0
    %1999 = vmatpush.msra.mxu0 0.0
    %2000 = vmatpush.msra.mxu0 0.0
    %2001 = vmatpush.msra.mxu0 0.0
    %2002 = vmatpush.msra.mxu0 0.0
    %2003 = vmatpush.msra.mxu0 %v40
    %2004 = vmatpush.msra.mxu0 %v39
    %2005 = vmatpush.msra.mxu0 %v38
    %2006 = vmatpush.msra.mxu0 %v37
    %2007 = vmatmul.f32.gmra.mxu0 %v1971
    %v2008 = vpop.f32.mrf.mxu0
    %v2009 = vadd.f32 %v1969, %v2008
    %2010 = vmatmul.f32.gmra.mxu0 %v1974
    %v2011 = vpop.f32.mrf.mxu0
    %v2012 = vadd.f32 %v1969, %v2011
    %2013 = vmatmul.f32.gmra.mxu0 %v1977
    %v2014 = vpop.f32.mrf.mxu0
    %v2015 = vadd.f32 %v1969, %v2014
    %2016 = vmatmul.f32.gmra.mxu0 %v1980
    %v2017 = vpop.f32.mrf.mxu0
    %v2018 = vadd.f32 %v1969, %v2017
    %2019 = vmatmul.f32.gmra.mxu0 %v1983
    %v2020 = vpop.f32.mrf.mxu0
    %v2021 = vadd.f32 %v1969, %v2020
    %2022 = vmatmul.f32.gmra.mxu0 %v1986
    %v2023 = vpop.f32.mrf.mxu0
    %v2024 = vadd.f32 %v1969, %v2023
    %2025 = vmatmul.f32.gmra.mxu0 %v1989
    %v2026 = vpop.f32.mrf.mxu0
    %v2027 = vadd.f32 %v1969, %v2026
    %2028 = vdwg.mxu0
    %2029 = vst [vmem:[#allocation4] sm:$0xff] %v2009
    %2030 = vst [vmem:[#allocation4 + $0x8] sm:$0xff] %v2012
    %2031 = vst [vmem:[#allocation4 + $0x10] sm:$0xff] %v2015
    %2032 = vst [vmem:[#allocation4 + $0x18] sm:$0xff] %v2018
    %2033 = vst [vmem:[#allocation4 + $0x20] sm:$0xff] %v2021
    %2034 = vst [vmem:[#allocation4 + $0x28] sm:$0xff] %v2024
    %2035 = vst [vmem:[#allocation4 + $0x30] sm:$0xff] %v2027
    // Predicated region
    $region18: #{tpu_custom_call.1} parent=1 // pred_check
      _
    $region19: #{tpu_custom_call.1} parent=1 // pred_check_branch
      %2037 = sbr.rel (0) target = $region21
    $region20: #{tpu_custom_call.1} parent=1 // pred_region
      %2039 = vsyncadd [#allocation5], 0
      %s2040 = sshll.u32 [#allocation4], 4
      %s2041 = int_to_ptr.vmem [resolvable:$true] %s2040
      %s2042 = sshll.u32 %s4, 4
      %s2043 = int_to_ptr.hbm [resolvable:$true] %s2042
      %2048 = dma.vmem_to_hbm [thread:$0]  %s2041, 896, %s2043, [#allocation5], 128, 128, 8
    $region21: #{tpu_custom_call.1} parent=1 // pred_fallthru
      _
    // Predicated region
    $region22: #{tpu_custom_call.1} parent=1 // pred_check
      _
    $region23: #{tpu_custom_call.1} parent=1 // pred_check_branch
      %2050 = sbr.rel (0) target = $region25
    $region24: #{tpu_custom_call.1} parent=1 // pred_region
      %2052 = dma.done [#allocation5], 896
    $region25: #{tpu_custom_call.1} parent=1 // pred_fallthru
      _
    %2053 = vsyncpa [#allocation5], 1

</llo_original>
